<compile_context>
chip_gen: v6e
topology: v6e:2x2x1
jax: 0.10.0
libtpu: 0.0.40
codegen_flags: <defaults>
</compile_context>

<pallas_src>
import functools
import math

import jax
import jax.numpy as jnp
from jax import lax
from jax.experimental import pallas as pl
from jax.experimental.pallas import tpu as pltpu

BN_EPS = 1e-5                                   # eval-mode BN: gamma=1, beta=0, mean=0, var=1
BN_FOLD = 1.0 / math.sqrt(1.0 + BN_EPS)         # folded into weights on the host
_F32_MAX = float(jnp.finfo(jnp.float32).max)
_VMEM_LIMIT = 32 * 1024 * 1024                  # explicit scoped-VMEM budget, safe on v5e/v6e/v7x


def _round_up(x, m):
    return ((x + m - 1) // m) * m


def _pad_lanes(x, n_pad):
    """Zero-pad the last (lane / point) dim of x up to n_pad."""
    n = x.shape[-1]
    if n == n_pad:
        return x
    pad = [(0, 0)] * (x.ndim - 1) + [(0, n_pad - n)]
    return jnp.pad(x, pad)


def _pick_lane_tile(n_pad, per_lane_bytes=4096, budget=8 << 20, cap=512):
    """Largest lane tile in {128,256,512} dividing n_pad under a VMEM budget.
    Only falls back to the full extent for small arrays (n_pad < 128)."""
    if n_pad < 128 or n_pad % 128 != 0:
        return n_pad
    best = 128
    for cand in (256, 512):
        if cand <= cap and n_pad % cand == 0 and cand * max(per_lane_bytes, 1) <= budget:
            best = cand
    return best


# ----------------------------------------------------------------------------
# Kernel 1: fused knn + neighbour gather + edge MLP (+BN+ReLU) + max over k
#           (channels-first; nothing per-neighbour ever leaves VMEM)
# ----------------------------------------------------------------------------
def _edge_conv_fused_kernel(xq_ref, xa_ref, *refs, k, n_extra, n_valid, idx_bits):
    o_ref = refs[-1]
    wrefs = refs[:-1]
    wc = wrefs[0][...]                          # (C1, C)  bf16 == (W_center - W_diff) * bn_scale
    wd = wrefs[1][...]                          # (C1, C)  bf16 ==  W_diff * bn_scale
    b0 = wrefs[2][...]                          # (C1, 1)  f32
    extra = [(wrefs[3 + 2 * e][...], wrefs[4 + 2 * e][...]) for e in range(n_extra)]

    xq = xq_ref[0]                              # (C, tn)    f32  query tile (channels-first)
    xa = xa_ref[0]                              # (C, Npad)  f32  whole point cloud of this batch

    # ---- pairwise squared distances (keep f32 so neighbour order is stable) ----
    ones_c = jnp.ones((xq.shape[0], 1), jnp.float32)
    sqq = lax.dot_general(xq * xq, ones_c, (((0,), (0,)), ((), ())),
                          preferred_element_type=jnp.float32)            # (tn, 1)
    sqa = jnp.sum(xa * xa, axis=0, keepdims=True)                        # (1, Npad)
    gram = lax.dot_general(xq, xa, (((0,), (0,)), ((), ())),
                           preferred_element_type=jnp.float32)           # (tn, Npad)
    d = jnp.maximum(sqq + sqa - 2.0 * gram, 0.0)

    # ---- pack (distance | column index) into one order-preserving f32 key ----
    col = lax.broadcasted_iota(jnp.int32, d.shape, 1)
    keep = jnp.int32(-(1 << idx_bits))                 # clears the low idx_bits mantissa bits
    key_bits = (pltpu.bitcast(d, jnp.int32) & keep) | col
    key = pltpu.bitcast(key_bits, jnp.float32)         # non-negative, unique per column
    if n_valid < d.shape[1]:
        key = jnp.where(col < n_valid, key, _F32_MAX)  # padded points never become neighbours

    xq_b = xq.astype(jnp.bfloat16)
    xa_b = xa.astype(jnp.bfloat16)
    # centre contribution + bias, shared by all k neighbours (hoisted out of the k-loop)
    hcb = lax.dot_general(wc, xq_b, (((1,), (0,)), ((), ())),
                          preferred_element_type=jnp.float32) + b0       # (C1, tn)

    acc = None
    for _ in range(k):                                  # static unroll; k is small
        kmin = jnp.min(key, axis=-1, keepdims=True)     # single cross-lane reduce per neighbour
        onehot = key == kmin                            # exactly one-hot per row (keys unique)
        sel = jnp.where(onehot, 1.0, 0.0).astype(jnp.bfloat16)           # (tn, Npad)
        # "gather": one-hot matmul against the VMEM-resident point cloud  -> (C, tn)
        nbr = lax.dot_general(xa_b, sel, (((1,), (1,)), ((), ())),
                              preferred_element_type=jnp.float32)
        h = jnp.maximum(
            hcb + lax.dot_general(wd, nbr.astype(jnp.bfloat16), (((1,), (0,)), ((), ())),
                                  preferred_element_type=jnp.float32), 0.0)
        for (w, b) in extra:
            h = jnp.maximum(
                lax.dot_general(w, h.astype(jnp.bfloat16), (((1,), (0,)), ((), ())),
                                preferred_element_type=jnp.float32) + b, 0.0)
        acc = h if acc is None else jnp.maximum(acc, h)                  # running max over k
        key = jnp.where(onehot, _F32_MAX, key)          # knock the selected column out

    o_ref[0] = acc.astype(o_ref.dtype)


def edge_conv_block(x, layers, k, n_valid):
    """Fused DGCNN edge conv.  x: (B, C, Npad) f32 channels-first -> (B, Cout, Npad)."""
    B, C, Np = x.shape
    wc, wd, b0 = layers[0]
    extras = layers[1:]
    c_out = extras[-1][0].shape[0] if extras else wc.shape[0]
    # big (tn, Npad) temporaries: d/key/onehot/sel  (~4 f32 copies per lane)
    tn = _pick_lane_tile(Np, per_lane_bytes=4 * Np * 4)
    idx_bits = max(1, (Np - 1).bit_length())

    flat = [wc, wd, b0]
    in_specs = [
        pl.BlockSpec((1, C, tn), lambda b, i: (b, 0, i)),
        pl.BlockSpec((1, C, Np), lambda b, i: (b, 0, 0)),   # whole cloud, re-fetched only per batch
        pl.BlockSpec(wc.shape, lambda b, i: (0, 0)),
        pl.BlockSpec(wd.shape, lambda b, i: (0, 0)),
        pl.BlockSpec(b0.shape, lambda b, i: (0, 0)),
    ]
    for (w, bia) in extras:
        flat += [w, bia]
        in_specs += [pl.BlockSpec(w.shape, lambda b, i: (0, 0)),
                     pl.BlockSpec(bia.shape, lambda b, i: (0, 0))]

    return pl.pallas_call(
        functools.partial(_edge_conv_fused_kernel, k=k, n_extra=len(extras),
                          n_valid=n_valid, idx_bits=idx_bits),
        out_shape=jax.ShapeDtypeStruct((B, c_out, Np), jnp.float32),
        grid_spec=pltpu.PrefetchScalarGridSpec(
            num_scalar_prefetch=0,
            grid=(B, Np // tn),
            in_specs=in_specs,
            out_specs=pl.BlockSpec((1, c_out, tn), lambda b, i: (b, 0, i)),
        ),
        compiler_params=pltpu.CompilerParams(
            dimension_semantics=("parallel", "parallel"),
            vmem_limit_bytes=_VMEM_LIMIT),
    )(x, x, *flat)


# ----------------------------------------------------------------------------
# Kernel 2: shared MLP (+BN+ReLU) fused with max over points
#           (tiled over N, resident running-max accumulator)
# ----------------------------------------------------------------------------
def _mlp_maxpoints_kernel(x_ref, *refs, n_layers, n_valid, tn):
    o_ref = refs[-1]
    wrefs = refs[:-1]
    i = pl.program_id(1)

    h = x_ref[0]                                        # (Cin, tn) f32
    pos = 0
    for _ in range(n_layers):
        w, b = wrefs[pos][...], wrefs[pos + 1][...]
        pos += 2
        h = jnp.maximum(
            lax.dot_general(w, h.astype(jnp.bfloat16), (((1,), (0,)), ((), ())),
                            preferred_element_type=jnp.float32) + b, 0.0)
    if n_valid is not None:                             # mask padded lanes out of the max
        lane = lax.broadcasted_iota(jnp.int32, h.shape, 1) + i * tn
        h = jnp.where(lane < n_valid, h, -jnp.inf)
    part = jnp.max(h, axis=-1, keepdims=True)           # (Cout, 1)

    @pl.when(i == 0)
    def _():
        o_ref[0] = part

    @pl.when(i != 0)
    def _():
        o_ref[0] = jnp.maximum(o_ref[0], part)


def mlp_max_points(x, layers, n_valid):
    """x: (B, Cin, Npad) -> (B, Cout): pointwise MLP then max over the valid points."""
    B, C, Np = x.shape
    c_out = layers[-1][0].shape[0]
    tn = _pick_lane_tile(Np, per_lane_bytes=4 * (C + sum(w.shape[0] for (w, _) in layers)))
    flat = []
    in_specs = [pl.BlockSpec((1, C, tn), lambda b, i: (b, 0, i))]
    for (w, bia) in layers:
        flat += [w, bia]
        in_specs += [pl.BlockSpec(w.shape, lambda b, i: (0, 0)),
                     pl.BlockSpec(bia.shape, lambda b, i: (0, 0))]
    out = pl.pallas_call(
        functools.partial(_mlp_maxpoints_kernel, n_layers=len(layers),
                          n_valid=(n_valid if n_valid < Np else None), tn=tn),
        out_shape=jax.ShapeDtypeStruct((B, c_out, 1), jnp.float32),
        grid_spec=pltpu.PrefetchScalarGridSpec(
            num_scalar_prefetch=0,
            grid=(B, Np // tn),
            in_specs=in_specs,
            out_specs=pl.BlockSpec((1, c_out, 1), lambda b, i: (b, 0, 0)),
        ),
        compiler_params=pltpu.CompilerParams(
            dimension_semantics=("parallel", "arbitrary"),
            vmem_limit_bytes=_VMEM_LIMIT),
    )(x, *flat)
    return out[:, :, 0]


# ----------------------------------------------------------------------------
# Kernel 3: fused segmentation head (mlp_seg -> conv_seg -> seg_logit)
#           global/label columns of the first layer pre-folded into a per-batch
#           bias; writes (B, num_seg_classes, N) directly (lane-dense).
# ----------------------------------------------------------------------------
def _seg_head_kernel(xi_ref, bias_ref, *refs, n_extra):
    o_ref = refs[-1]
    wrefs = refs[:-1]
    w_i = wrefs[0][...]                                 # (C1, Ci) bf16
    xi = xi_ref[0].astype(jnp.bfloat16)                 # (Ci, tn)
    bias = bias_ref[0]                                  # (C1, 1)  per-batch: Wg@glob + Wl@lab + b0
    h = jnp.maximum(
        lax.dot_general(w_i, xi, (((1,), (0,)), ((), ())),
                        preferred_element_type=jnp.float32) + bias, 0.0)
    # dropout inside mlp_seg is identity at inference
    pos = 1
    for li in range(n_extra):
        w, b = wrefs[pos][...], wrefs[pos + 1][...]
        pos += 2
        h = lax.dot_general(w, h.astype(jnp.bfloat16), (((1,), (0,)), ((), ())),
                            preferred_element_type=jnp.float32) + b
        if li < n_extra - 1:                            # last layer (seg_logit): no ReLU
            h = jnp.maximum(h, 0.0)
    o_ref[0] = h.astype(o_ref.dtype)


def seg_head(inter, per_batch_bias, w_inter, extras):
    """inter: (B, Ci, Npad); per_batch_bias: (B, C1, 1) -> (B, num_seg_classes, Npad)."""
    B, Ci, Np = inter.shape
    c_out = extras[-1][0].shape[0]
    widths = [w_inter.shape[0]] + [w.shape[0] for (w, _) in extras]
    tn = _pick_lane_tile(Np, per_lane_bytes=4 * (Ci + sum(widths)))
    flat = [w_inter]
    in_specs = [
        pl.BlockSpec((1, Ci, tn), lambda b, i: (b, 0, i)),
        pl.BlockSpec((1, w_inter.shape[0], 1), lambda b, i: (b, 0, 0)),
        pl.BlockSpec(w_inter.shape, lambda b, i: (0, 0)),
    ]
    for (w, bia) in extras:
        flat += [w, bia]
        in_specs += [pl.BlockSpec(w.shape, lambda b, i: (0, 0)),
                     pl.BlockSpec(bia.shape, lambda b, i: (0, 0))]
    return pl.pallas_call(
        functools.partial(_seg_head_kernel, n_extra=len(extras)),
        out_shape=jax.ShapeDtypeStruct((B, c_out, Np), jnp.float32),
        grid_spec=pltpu.PrefetchScalarGridSpec(
            num_scalar_prefetch=0,
            grid=(B, Np // tn),
            in_specs=in_specs,
            out_specs=pl.BlockSpec((1, c_out, tn), lambda b, i: (b, 0, i)),
        ),
        compiler_params=pltpu.CompilerParams(
            dimension_semantics=("parallel", "parallel"),
            vmem_limit_bytes=_VMEM_LIMIT),
    )(inter, per_batch_bias, *flat)


# ----------------------------------------------------------------------------
# Parameters (BN folded, bf16 weights for kernel layers; (Cout, Cin) layout)
# ----------------------------------------------------------------------------
def _xavier_uniform(key, cout, cin):
    bound = math.sqrt(6.0 / (cin + cout))
    return jax.random.uniform(key, (cout, cin), jnp.float32, -bound, bound)


def make_conv_bn(key, cin, cout, dtype=jnp.bfloat16):
    # TODO(synk): real checkpoints need per-channel gamma/sqrt(var+eps) folded into the
    # weight and beta - mean*scale into the bias; here eval-mode identity stats are assumed.
    w = (_xavier_uniform(key, cout, cin) * BN_FOLD).astype(dtype)
    return (w, jnp.zeros((cout, 1), jnp.float32))


def make_mlp(key, cin, channels, dtype=jnp.bfloat16):
    layers, c = [], cin
    for cout in channels:
        key, sub = jax.random.split(key)
        layers.append(make_conv_bn(sub, c, cout, dtype))
        c = cout
    return layers, c


def make_edge_mlp(key, cin, channels):
    """First layer acts on concat([center, nbr - center]); split so the edge tensor
    never exists:  W @ [c ; n-c] = (W_c - W_d) @ c + W_d @ n."""
    channels = (channels,) if isinstance(channels, int) else tuple(channels)
    keys = jax.random.split(key, len(channels))
    c = cin
    w = _xavier_uniform(keys[0], channels[0], 2 * c) * BN_FOLD
    wc = (w[:, :c] - w[:, c:]).astype(jnp.bfloat16)     # center @ (W_c - W_d)
    wd = w[:, c:].astype(jnp.bfloat16)                  # nbr    @  W_d
    layers = [(wc, wd, jnp.zeros((channels[0], 1), jnp.float32))]
    c = channels[0]
    for i, cout in enumerate(channels[1:], start=1):
        layers.append(make_conv_bn(keys[i], c, cout))
        c = cout
    return layers, c


def init_tnet(key, in_ch, out_ch, conv_channels=(16, 16), local_channels=(32,),
              global_channels=(16,)):
    k1, k2, k3 = jax.random.split(key, 3)
    edge, c = make_edge_mlp(k1, in_ch, conv_channels)
    local, c = make_mlp(k2, c, local_channels)
    glob, c = make_mlp(k3, c, global_channels, dtype=jnp.float32)   # tiny -> stays in XLA
    # matches TNet.reset_parameters: final linear zero-init -> identity transform at init
    lin = (jnp.zeros((in_ch * out_ch, c), jnp.float32),
           jnp.zeros((in_ch * out_ch, 1), jnp.float32))
    return dict(edge=edge, local=local, glob=glob, lin=lin, in_ch=in_ch, out_ch=out_ch)


def init_model(key, in_ch=3, num_classes=4, num_seg_classes=5,
               edge_conv_channels=((16, 16), (16, 16), 16),
               local_channels=(32,), seg_channels=(32, 32, 16), k=4):
    keys = jax.random.split(key, 16)
    p = {'k': k, 'num_classes': num_classes}
    p['tnet'] = init_tnet(keys[0], in_ch, in_ch)

    edge_convs, inter_ch, c = [], [], in_ch
    for i, cc in enumerate(edge_conv_channels):
        layers, cout = make_edge_mlp(keys[1 + i], c, cc)
        edge_convs.append(layers)
        inter_ch.append(cout)
        c = cout
    p['edge_convs'] = edge_convs

    LABEL_CHANNELS = 64
    # 1x1 conv on a one-hot label is pointwise & tiny -> plain jnp
    p['mlp_label'] = make_conv_bn(keys[5], num_classes, LABEL_CHANNELS, dtype=jnp.float32)
    p['mlp_local'], local_out = make_mlp(keys[6], sum(inter_ch), local_channels)

    sum_inter = sum(inter_ch)
    w1 = _xavier_uniform(keys[7], seg_channels[0],
                         sum_inter + local_out + LABEL_CHANNELS) * BN_FOLD
    p['seg_first'] = dict(
        w_inter=w1[:, :sum_inter].astype(jnp.bfloat16),             # in-kernel (per point)
        w_glob=w1[:, sum_inter:sum_inter + local_out],              # folded into per-batch bias
        w_label=w1[:, sum_inter + local_out:],                      # folded into per-batch bias
        b0=jnp.zeros((seg_channels[0], 1), jnp.float32))
    extras, c, ki = [], seg_channels[0], 8
    for ch in seg_channels[1:-1]:                       # remaining mlp_seg layers (dropout = id)
        extras.append(make_conv_bn(keys[ki], c, ch)); c = ch; ki += 1
    extras.append(make_conv_bn(keys[ki], c, seg_channels[-1])); ki += 1     # conv_seg
    w_logit = _xavier_uniform(keys[ki], num_seg_classes, seg_channels[-1])
    extras.append((w_logit.astype(jnp.bfloat16),
                   jnp.zeros((num_seg_classes, 1), jnp.float32)))            # seg_logit (plain conv)
    p['seg_extras'] = extras
    return p


# ----------------------------------------------------------------------------
# Forward pass
# ----------------------------------------------------------------------------
def _dense_mlp(x, layers, last_relu=True):
    """Tiny per-batch MLPs (rows = batch): plain XLA — a Pallas launch is pure overhead."""
    h = x
    for li, (w, b) in enumerate(layers):
        h = h @ w.astype(jnp.float32).T + b[:, 0]
        if li < len(layers) - 1 or last_relu:
            h = jnp.maximum(h, 0.0)
    return h


def tnet_forward(x, p, k, n_valid):
    B = x.shape[0]
    h = edge_conv_block(x, p['edge'], k, n_valid)               # (B, c_edge, Npad)   [Pallas]
    g = mlp_max_points(h, p['local'], n_valid)                  # (B, c_local)        [Pallas]
    t = _dense_mlp(g, p['glob'] + [p['lin']], last_relu=False)  # (B, in*out)         [XLA]
    t = t.reshape(B, p['out_ch'], p['in_ch'])
    return t + jnp.eye(p['out_ch'], p['in_ch'], dtype=t.dtype)


def dgcnn_part_seg_forward(points, cls_label, p):
    """points: (B, C, N) like PyTorch NCW; cls_label: (B,) int."""
    B, C, N = points.shape
    k = p['k']
    # pad the point axis once to a lane-friendly multiple of 128 (full extent if tiny);
    # padded points are masked out of knn candidates and the global max inside the kernels.
    n_pad = N if N < 128 else _round_up(N, 128)
    x = _pad_lanes(points.astype(jnp.float32), n_pad)            # (B, C, Npad) channels-first

    trans = tnet_forward(x, p['tnet'], k, N)                     # (B, C, C)
    x = jnp.einsum('bij,bjn->bin', trans, x)                     # torch.bmm(trans, x); tiny -> XLA

    feats = []
    for layers in p['edge_convs']:
        x = edge_conv_block(x, layers, k, N)                     # fused knn+gather+MLP+max  [Pallas]
        feats.append(x)
    inter = jnp.concatenate(feats, axis=1)                       # (B, sum_inter, Npad)

    glob = mlp_max_points(inter, p['mlp_local'], N)              # (B, c_local) global feat  [Pallas]

    one_hot = jax.nn.one_hot(cls_label, p['num_classes'], dtype=jnp.float32)
    lab = _dense_mlp(one_hot, [p['mlp_label']], last_relu=True)  # (B, 64)                   [XLA]

    sf = p['seg_first']
    # per-batch part of the seg head's first layer (global + label columns) -> a bias
    bias = glob @ sf['w_glob'].T + lab @ sf['w_label'].T + sf['b0'][:, 0]    # (B, C1)
    bias = bias[:, :, None]                                                   # (B, C1, 1)

    logit = seg_head(inter, bias, sf['w_inter'], p['seg_extras'])   # (B, S, Npad)           [Pallas]
    seg_logit = logit[:, :, :N]                                     # drop padding; already NCW
    return {'seg_logit': seg_logit, 'trans_input': trans}


if __name__ == "__main__":
    key = jax.random.PRNGKey(0)
    kp, kx, kl = jax.random.split(key, 3)

    B, C, N = 2, 3, 64
    num_classes, num_seg_classes = 4, 5

    params = init_model(kp, in_ch=C, num_classes=num_classes,
                        num_seg_classes=num_seg_classes, k=4)
    points = jax.random.normal(kx, (B, C, N), jnp.float32)
    cls_label = jax.random.randint(kl, (B,), 0, num_classes)

    out = dgcnn_part_seg_forward(points, cls_label, params)
    jax.block_until_ready(out['seg_logit'])
    jax.block_until_ready(out['trans_input'])
    assert out['seg_logit'].shape == (B, num_seg_classes, N)
    assert out['trans_input'].shape == (B, C, C)
    print("KERNEL_OK")
</pallas_src>

<mosaic_0001>
module attributes {stable_mosaic.version = 11 : i64} {
  func.func @_edge_conv_fused_kernel(%arg0: i32, %arg1: i32, %arg2: memref<1x3x64xf32, #tpu.memory_space<vmem>>, %arg3: memref<1x3x64xf32, #tpu.memory_space<vmem>>, %arg4: memref<16x3xbf16, #tpu.memory_space<vmem>>, %arg5: memref<16x3xbf16, #tpu.memory_space<vmem>>, %arg6: memref<16x1xf32, #tpu.memory_space<vmem>>, %arg7: memref<16x16xbf16, #tpu.memory_space<vmem>>, %arg8: memref<16x1xf32, #tpu.memory_space<vmem>>, %arg9: memref<1x16x64xf32, #tpu.memory_space<vmem>>) attributes {dimension_semantics = [#tpu.dimension_semantics<parallel>, #tpu.dimension_semantics<parallel>], iteration_bounds = array<i64: 2, 1>, scalar_prefetch = 0 : i64, scratch_operands = 0 : i64, tpu.core_type = #tpu.core_type<tc>, window_params = [{transform_indices = @transform_0, window_bounds = array<i64: 1, 3, 64>}, {transform_indices = @transform_1, window_bounds = array<i64: 1, 3, 64>}, {pipeline_mode = #tpu.pipeline_mode<synchronous>, transform_indices = @transform_2, window_bounds = array<i64: 16, 3>}, {pipeline_mode = #tpu.pipeline_mode<synchronous>, transform_indices = @transform_3, window_bounds = array<i64: 16, 3>}, {pipeline_mode = #tpu.pipeline_mode<synchronous>, transform_indices = @transform_4, window_bounds = array<i64: 16, 1>}, {pipeline_mode = #tpu.pipeline_mode<synchronous>, transform_indices = @transform_5, window_bounds = array<i64: 16, 16>}, {pipeline_mode = #tpu.pipeline_mode<synchronous>, transform_indices = @transform_6, window_bounds = array<i64: 16, 1>}, {transform_indices = @transform_7, window_bounds = array<i64: 1, 16, 64>}]} {
    %c0 = arith.constant 0 : index
    %c0_0 = arith.constant 0 : index
    %0 = vector.load %arg4[%c0, %c0_0] : memref<16x3xbf16, #tpu.memory_space<vmem>>, vector<16x3xbf16>
    %c0_1 = arith.constant 0 : index
    %c0_2 = arith.constant 0 : index
    %1 = vector.load %arg5[%c0_1, %c0_2] : memref<16x3xbf16, #tpu.memory_space<vmem>>, vector<16x3xbf16>
    %c0_3 = arith.constant 0 : index
    %c0_4 = arith.constant 0 : index
    %2 = vector.load %arg6[%c0_3, %c0_4] : memref<16x1xf32, #tpu.memory_space<vmem>>, vector<16x1xf32>
    %c0_5 = arith.constant 0 : index
    %c0_6 = arith.constant 0 : index
    %3 = vector.load %arg7[%c0_5, %c0_6] : memref<16x16xbf16, #tpu.memory_space<vmem>>, vector<16x16xbf16>
    %c0_7 = arith.constant 0 : index
    %c0_8 = arith.constant 0 : index
    %4 = vector.load %arg8[%c0_7, %c0_8] : memref<16x1xf32, #tpu.memory_space<vmem>>, vector<16x1xf32>
    %c0_9 = arith.constant 0 : index
    %c0_10 = arith.constant 0 : index
    %c0_11 = arith.constant 0 : index
    %5 = vector.load %arg2[%c0_9, %c0_10, %c0_11] : memref<1x3x64xf32, #tpu.memory_space<vmem>>, vector<1x3x64xf32>
    %6 = vector.shape_cast %5 : vector<1x3x64xf32> to vector<3x64xf32>
    %c0_12 = arith.constant 0 : index
    %c0_13 = arith.constant 0 : index
    %c0_14 = arith.constant 0 : index
    %7 = vector.load %arg3[%c0_12, %c0_13, %c0_14] : memref<1x3x64xf32, #tpu.memory_space<vmem>>, vector<1x3x64xf32>
    %8 = vector.shape_cast %7 : vector<1x3x64xf32> to vector<3x64xf32>
    %cst = arith.constant 1.000000e+00 : f32
    %9 = vector.broadcast %cst : f32 to vector<3x1xf32>
    %10 = arith.mulf %6, %6 : vector<3x64xf32>
    %cst_15 = arith.constant dense<0.000000e+00> : vector<64x1xf32>
    %11 = tpu.matmul %10, %9, %cst_15 {dimension_numbers = #tpu.dot_dimension_numbers<[0], [0], [1], [1], [0, 1, 1, 1], [], []>} : vector<3x64xf32>, vector<3x1xf32>, vector<64x1xf32> -> vector<64x1xf32>
    %12 = arith.mulf %8, %8 : vector<3x64xf32>
    %cst_16 = arith.constant dense<0.000000e+00> : vector<64xf32>
    %13 = vector.multi_reduction <add>, %12, %cst_16 [0] : vector<3x64xf32> to vector<64xf32>
    %14 = vector.shape_cast %13 : vector<64xf32> to vector<1x64xf32>
    %cst_17 = arith.constant dense<0.000000e+00> : vector<64x64xf32>
    %15 = tpu.matmul %6, %8, %cst_17 {dimension_numbers = #tpu.dot_dimension_numbers<[0], [0], [1], [1], [0, 1, 1, 1], [], []>} : vector<3x64xf32>, vector<3x64xf32>, vector<64x64xf32> -> vector<64x64xf32>
    %16 = vector.broadcast %11 : vector<64x1xf32> to vector<64x64xf32>
    %17 = vector.broadcast %14 : vector<1x64xf32> to vector<64x64xf32>
    %18 = arith.addf %16, %17 : vector<64x64xf32>
    %cst_18 = arith.constant 2.000000e+00 : f32
    %19 = vector.broadcast %cst_18 : f32 to vector<64x64xf32>
    %20 = arith.mulf %19, %15 : vector<64x64xf32>
    %21 = arith.subf %18, %20 : vector<64x64xf32>
    %cst_19 = arith.constant 0.000000e+00 : f32
    %22 = vector.broadcast %cst_19 : f32 to vector<64x64xf32>
    %23 = arith.maximumf %21, %22 : vector<64x64xf32>
    %24 = tpu.iota {dimensions = array<i32: 1>} : vector<64x64xi32>
    %25 = tpu.bitcast %23 : vector<64x64xf32> -> vector<64x64xi32>
    %c-64_i32 = arith.constant -64 : i32
    %26 = vector.broadcast %c-64_i32 : i32 to vector<64x64xi32>
    %27 = arith.andi %25, %26 : vector<64x64xi32>
    %28 = arith.ori %27, %24 : vector<64x64xi32>
    %29 = tpu.bitcast %28 : vector<64x64xi32> -> vector<64x64xf32>
    %30 = arith.truncf %6 : vector<3x64xf32> to vector<3x64xbf16>
    %31 = arith.truncf %8 : vector<3x64xf32> to vector<3x64xbf16>
    %cst_20 = arith.constant dense<0.000000e+00> : vector<16x64xf32>
    %32 = tpu.matmul %0, %30, %cst_20 {dimension_numbers = #tpu.dot_dimension_numbers<[1], [0], [0], [1], [0, 0, 1, 1], [], []>} : vector<16x3xbf16>, vector<3x64xbf16>, vector<16x64xf32> -> vector<16x64xf32>
    %33 = vector.broadcast %2 : vector<16x1xf32> to vector<16x64xf32>
    %34 = arith.addf %32, %33 : vector<16x64xf32>
    %cst_21 = arith.constant dense<0x7F800000> : vector<64xf32>
    %35 = vector.multi_reduction <minimumf>, %29, %cst_21 [1] : vector<64x64xf32> to vector<64xf32>
    %36 = vector.shape_cast %35 : vector<64xf32> to vector<64x1xf32>
    %37 = vector.broadcast %36 : vector<64x1xf32> to vector<64x64xf32>
    %38 = arith.cmpf oeq, %29, %37 : vector<64x64xf32>
    %cst_22 = arith.constant 1.000000e+00 : f32
    %cst_23 = arith.constant 0.000000e+00 : f32
    %39 = vector.broadcast %cst_22 : f32 to vector<64x64xf32>
    %40 = vector.broadcast %cst_23 : f32 to vector<64x64xf32>
    %41 = arith.select %38, %39, %40 : vector<64x64xi1>, vector<64x64xf32>
    %42 = arith.truncf %41 : vector<64x64xf32> to vector<64x64xbf16>
    %cst_24 = arith.constant dense<0.000000e+00> : vector<3x64xf32>
    %43 = tpu.matmul %31, %42, %cst_24 {dimension_numbers = #tpu.dot_dimension_numbers<[1], [1], [0], [0], [0, 0, 1, 0], [], []>} : vector<3x64xbf16>, vector<64x64xbf16>, vector<3x64xf32> -> vector<3x64xf32>
    %44 = arith.truncf %43 : vector<3x64xf32> to vector<3x64xbf16>
    %cst_25 = arith.constant dense<0.000000e+00> : vector<16x64xf32>
    %45 = tpu.matmul %1, %44, %cst_25 {dimension_numbers = #tpu.dot_dimension_numbers<[1], [0], [0], [1], [0, 0, 1, 1], [], []>} : vector<16x3xbf16>, vector<3x64xbf16>, vector<16x64xf32> -> vector<16x64xf32>
    %46 = arith.addf %34, %45 : vector<16x64xf32>
    %cst_26 = arith.constant 0.000000e+00 : f32
    %47 = vector.broadcast %cst_26 : f32 to vector<16x64xf32>
    %48 = arith.maximumf %46, %47 : vector<16x64xf32>
    %49 = arith.truncf %48 : vector<16x64xf32> to vector<16x64xbf16>
    %cst_27 = arith.constant dense<0.000000e+00> : vector<16x64xf32>
    %50 = tpu.matmul %3, %49, %cst_27 {dimension_numbers = #tpu.dot_dimension_numbers<[1], [0], [0], [1], [0, 0, 1, 1], [], []>} : vector<16x16xbf16>, vector<16x64xbf16>, vector<16x64xf32> -> vector<16x64xf32>
    %51 = vector.broadcast %4 : vector<16x1xf32> to vector<16x64xf32>
    %52 = arith.addf %50, %51 : vector<16x64xf32>
    %cst_28 = arith.constant 0.000000e+00 : f32
    %53 = vector.broadcast %cst_28 : f32 to vector<16x64xf32>
    %54 = arith.maximumf %52, %53 : vector<16x64xf32>
    %cst_29 = arith.constant 3.40282347E+38 : f32
    %55 = vector.broadcast %cst_29 : f32 to vector<64x64xf32>
    %56 = arith.select %38, %55, %29 : vector<64x64xi1>, vector<64x64xf32>
    %cst_30 = arith.constant dense<0x7F800000> : vector<64xf32>
    %57 = vector.multi_reduction <minimumf>, %56, %cst_30 [1] : vector<64x64xf32> to vector<64xf32>
    %58 = vector.shape_cast %57 : vector<64xf32> to vector<64x1xf32>
    %59 = vector.broadcast %58 : vector<64x1xf32> to vector<64x64xf32>
    %60 = arith.cmpf oeq, %56, %59 : vector<64x64xf32>
    %cst_31 = arith.constant 1.000000e+00 : f32
    %cst_32 = arith.constant 0.000000e+00 : f32
    %61 = vector.broadcast %cst_31 : f32 to vector<64x64xf32>
    %62 = vector.broadcast %cst_32 : f32 to vector<64x64xf32>
    %63 = arith.select %60, %61, %62 : vector<64x64xi1>, vector<64x64xf32>
    %64 = arith.truncf %63 : vector<64x64xf32> to vector<64x64xbf16>
    %cst_33 = arith.constant dense<0.000000e+00> : vector<3x64xf32>
    %65 = tpu.matmul %31, %64, %cst_33 {dimension_numbers = #tpu.dot_dimension_numbers<[1], [1], [0], [0], [0, 0, 1, 0], [], []>} : vector<3x64xbf16>, vector<64x64xbf16>, vector<3x64xf32> -> vector<3x64xf32>
    %66 = arith.truncf %65 : vector<3x64xf32> to vector<3x64xbf16>
    %cst_34 = arith.constant dense<0.000000e+00> : vector<16x64xf32>
    %67 = tpu.matmul %1, %66, %cst_34 {dimension_numbers = #tpu.dot_dimension_numbers<[1], [0], [0], [1], [0, 0, 1, 1], [], []>} : vector<16x3xbf16>, vector<3x64xbf16>, vector<16x64xf32> -> vector<16x64xf32>
    %68 = arith.addf %34, %67 : vector<16x64xf32>
    %cst_35 = arith.constant 0.000000e+00 : f32
    %69 = vector.broadcast %cst_35 : f32 to vector<16x64xf32>
    %70 = arith.maximumf %68, %69 : vector<16x64xf32>
    %71 = arith.truncf %70 : vector<16x64xf32> to vector<16x64xbf16>
    %cst_36 = arith.constant dense<0.000000e+00> : vector<16x64xf32>
    %72 = tpu.matmul %3, %71, %cst_36 {dimension_numbers = #tpu.dot_dimension_numbers<[1], [0], [0], [1], [0, 0, 1, 1], [], []>} : vector<16x16xbf16>, vector<16x64xbf16>, vector<16x64xf32> -> vector<16x64xf32>
    %73 = vector.broadcast %4 : vector<16x1xf32> to vector<16x64xf32>
    %74 = arith.addf %72, %73 : vector<16x64xf32>
    %cst_37 = arith.constant 0.000000e+00 : f32
    %75 = vector.broadcast %cst_37 : f32 to vector<16x64xf32>
    %76 = arith.maximumf %74, %75 : vector<16x64xf32>
    %77 = arith.maximumf %54, %76 : vector<16x64xf32>
    %cst_38 = arith.constant 3.40282347E+38 : f32
    %78 = vector.broadcast %cst_38 : f32 to vector<64x64xf32>
    %79 = arith.select %60, %78, %56 : vector<64x64xi1>, vector<64x64xf32>
    %cst_39 = arith.constant dense<0x7F800000> : vector<64xf32>
    %80 = vector.multi_reduction <minimumf>, %79, %cst_39 [1] : vector<64x64xf32> to vector<64xf32>
    %81 = vector.shape_cast %80 : vector<64xf32> to vector<64x1xf32>
    %82 = vector.broadcast %81 : vector<64x1xf32> to vector<64x64xf32>
    %83 = arith.cmpf oeq, %79, %82 : vector<64x64xf32>
    %cst_40 = arith.constant 1.000000e+00 : f32
    %cst_41 = arith.constant 0.000000e+00 : f32
    %84 = vector.broadcast %cst_40 : f32 to vector<64x64xf32>
    %85 = vector.broadcast %cst_41 : f32 to vector<64x64xf32>
    %86 = arith.select %83, %84, %85 : vector<64x64xi1>, vector<64x64xf32>
    %87 = arith.truncf %86 : vector<64x64xf32> to vector<64x64xbf16>
    %cst_42 = arith.constant dense<0.000000e+00> : vector<3x64xf32>
    %88 = tpu.matmul %31, %87, %cst_42 {dimension_numbers = #tpu.dot_dimension_numbers<[1], [1], [0], [0], [0, 0, 1, 0], [], []>} : vector<3x64xbf16>, vector<64x64xbf16>, vector<3x64xf32> -> vector<3x64xf32>
    %89 = arith.truncf %88 : vector<3x64xf32> to vector<3x64xbf16>
    %cst_43 = arith.constant dense<0.000000e+00> : vector<16x64xf32>
    %90 = tpu.matmul %1, %89, %cst_43 {dimension_numbers = #tpu.dot_dimension_numbers<[1], [0], [0], [1], [0, 0, 1, 1], [], []>} : vector<16x3xbf16>, vector<3x64xbf16>, vector<16x64xf32> -> vector<16x64xf32>
    %91 = arith.addf %34, %90 : vector<16x64xf32>
    %cst_44 = arith.constant 0.000000e+00 : f32
    %92 = vector.broadcast %cst_44 : f32 to vector<16x64xf32>
    %93 = arith.maximumf %91, %92 : vector<16x64xf32>
    %94 = arith.truncf %93 : vector<16x64xf32> to vector<16x64xbf16>
    %cst_45 = arith.constant dense<0.000000e+00> : vector<16x64xf32>
    %95 = tpu.matmul %3, %94, %cst_45 {dimension_numbers = #tpu.dot_dimension_numbers<[1], [0], [0], [1], [0, 0, 1, 1], [], []>} : vector<16x16xbf16>, vector<16x64xbf16>, vector<16x64xf32> -> vector<16x64xf32>
    %96 = vector.broadcast %4 : vector<16x1xf32> to vector<16x64xf32>
    %97 = arith.addf %95, %96 : vector<16x64xf32>
    %cst_46 = arith.constant 0.000000e+00 : f32
    %98 = vector.broadcast %cst_46 : f32 to vector<16x64xf32>
    %99 = arith.maximumf %97, %98 : vector<16x64xf32>
    %100 = arith.maximumf %77, %99 : vector<16x64xf32>
    %cst_47 = arith.constant 3.40282347E+38 : f32
    %101 = vector.broadcast %cst_47 : f32 to vector<64x64xf32>
    %102 = arith.select %83, %101, %79 : vector<64x64xi1>, vector<64x64xf32>
    %cst_48 = arith.constant dense<0x7F800000> : vector<64xf32>
    %103 = vector.multi_reduction <minimumf>, %102, %cst_48 [1] : vector<64x64xf32> to vector<64xf32>
    %104 = vector.shape_cast %103 : vector<64xf32> to vector<64x1xf32>
    %105 = vector.broadcast %104 : vector<64x1xf32> to vector<64x64xf32>
    %106 = arith.cmpf oeq, %102, %105 : vector<64x64xf32>
    %cst_49 = arith.constant 1.000000e+00 : f32
    %cst_50 = arith.constant 0.000000e+00 : f32
    %107 = vector.broadcast %cst_49 : f32 to vector<64x64xf32>
    %108 = vector.broadcast %cst_50 : f32 to vector<64x64xf32>
    %109 = arith.select %106, %107, %108 : vector<64x64xi1>, vector<64x64xf32>
    %110 = arith.truncf %109 : vector<64x64xf32> to vector<64x64xbf16>
    %cst_51 = arith.constant dense<0.000000e+00> : vector<3x64xf32>
    %111 = tpu.matmul %31, %110, %cst_51 {dimension_numbers = #tpu.dot_dimension_numbers<[1], [1], [0], [0], [0, 0, 1, 0], [], []>} : vector<3x64xbf16>, vector<64x64xbf16>, vector<3x64xf32> -> vector<3x64xf32>
    %112 = arith.truncf %111 : vector<3x64xf32> to vector<3x64xbf16>
    %cst_52 = arith.constant dense<0.000000e+00> : vector<16x64xf32>
    %113 = tpu.matmul %1, %112, %cst_52 {dimension_numbers = #tpu.dot_dimension_numbers<[1], [0], [0], [1], [0, 0, 1, 1], [], []>} : vector<16x3xbf16>, vector<3x64xbf16>, vector<16x64xf32> -> vector<16x64xf32>
    %114 = arith.addf %34, %113 : vector<16x64xf32>
    %cst_53 = arith.constant 0.000000e+00 : f32
    %115 = vector.broadcast %cst_53 : f32 to vector<16x64xf32>
    %116 = arith.maximumf %114, %115 : vector<16x64xf32>
    %117 = arith.truncf %116 : vector<16x64xf32> to vector<16x64xbf16>
    %cst_54 = arith.constant dense<0.000000e+00> : vector<16x64xf32>
    %118 = tpu.matmul %3, %117, %cst_54 {dimension_numbers = #tpu.dot_dimension_numbers<[1], [0], [0], [1], [0, 0, 1, 1], [], []>} : vector<16x16xbf16>, vector<16x64xbf16>, vector<16x64xf32> -> vector<16x64xf32>
    %119 = vector.broadcast %4 : vector<16x1xf32> to vector<16x64xf32>
    %120 = arith.addf %118, %119 : vector<16x64xf32>
    %cst_55 = arith.constant 0.000000e+00 : f32
    %121 = vector.broadcast %cst_55 : f32 to vector<16x64xf32>
    %122 = arith.maximumf %120, %121 : vector<16x64xf32>
    %123 = arith.maximumf %100, %122 : vector<16x64xf32>
    %c0_56 = arith.constant 0 : index
    %c0_57 = arith.constant 0 : index
    %c0_58 = arith.constant 0 : index
    %124 = vector.load %arg9[%c0_56, %c0_57, %c0_58] : memref<1x16x64xf32, #tpu.memory_space<vmem>>, vector<1x16x64xf32>
    %125 = vector.shape_cast %124 : vector<1x16x64xf32> to vector<16x64xf32>
    %126 = vector.shape_cast %123 : vector<16x64xf32> to vector<1x16x64xf32>
    tpu.vector_store %arg9[%c0_56, %c0_57, %c0_58], %126 {strides = array<i32>} : memref<1x16x64xf32, #tpu.memory_space<vmem>>, vector<1x16x64xf32>,
    return
  }
  func.func @transform_0(%arg0: i32, %arg1: i32) -> (i32, i32, i32) {
    %c0_i32 = arith.constant 0 : i32
    %c0_i32_0 = arith.constant 0 : i32
    return %arg0, %c0_i32, %arg1 : i32, i32, i32
  }
  func.func @transform_1(%arg0: i32, %arg1: i32) -> (i32, i32, i32) {
    %c0_i32 = arith.constant 0 : i32
    %c0_i32_0 = arith.constant 0 : i32
    %c0_i32_1 = arith.constant 0 : i32
    return %arg0, %c0_i32, %c0_i32_0 : i32, i32, i32
  }
  func.func @transform_2(%arg0: i32, %arg1: i32) -> (i32, i32) {
    %c0_i32 = arith.constant 0 : i32
    %c0_i32_0 = arith.constant 0 : i32
    %c0_i32_1 = arith.constant 0 : i32
    return %c0_i32, %c0_i32_0 : i32, i32
  }
  func.func @transform_3(%arg0: i32, %arg1: i32) -> (i32, i32) {
    %c0_i32 = arith.constant 0 : i32
    %c0_i32_0 = arith.constant 0 : i32
    %c0_i32_1 = arith.constant 0 : i32
    return %c0_i32, %c0_i32_0 : i32, i32
  }
  func.func @transform_4(%arg0: i32, %arg1: i32) -> (i32, i32) {
    %c0_i32 = arith.constant 0 : i32
    %c0_i32_0 = arith.constant 0 : i32
    %c0_i32_1 = arith.constant 0 : i32
    return %c0_i32, %c0_i32_0 : i32, i32
  }
  func.func @transform_5(%arg0: i32, %arg1: i32) -> (i32, i32) {
    %c0_i32 = arith.constant 0 : i32
    %c0_i32_0 = arith.constant 0 : i32
    %c0_i32_1 = arith.constant 0 : i32
    return %c0_i32, %c0_i32_0 : i32, i32
  }
  func.func @transform_6(%arg0: i32, %arg1: i32) -> (i32, i32) {
    %c0_i32 = arith.constant 0 : i32
    %c0_i32_0 = arith.constant 0 : i32
    %c0_i32_1 = arith.constant 0 : i32
    return %c0_i32, %c0_i32_0 : i32, i32
  }
  func.func @transform_7(%arg0: i32, %arg1: i32) -> (i32, i32, i32) {
    %c0_i32 = arith.constant 0 : i32
    %c0_i32_0 = arith.constant 0 : i32
    return %arg0, %c0_i32, %arg1 : i32, i32, i32
  }
}

</mosaic_0001>

<llo_original>
// kernel: tpu_custom_call.1
$region0: #{tpu_custom_call.1}
  #allocation0 [shape = 'u32[]', space=smem, size = 0x4, offset = 0x4, fixed_abs, tag = 'smem constant byte address 0x4 - core index']
  #allocation1 [shape = 'u32[144,128]{1,0:T(1,128)}', space=vmem, size = 0x12000, scoped, tag = 'internal scratch']
  %s0 = inlined_call_operand.vmem [shape: f32[2,3,64], index: 0, kind: input, shape index: {}]
  %s1 = inlined_call_operand.vmem [shape: f32[2,3,64], index: 1, kind: input, shape index: {}]
  %s2 = inlined_call_operand.vmem [shape: bf16[16,3], index: 2, kind: input, shape index: {}]
  %s3 = inlined_call_operand.vmem [shape: bf16[16,3], index: 3, kind: input, shape index: {}]
  %s4 = inlined_call_operand.vmem [shape: f32[16,1], index: 4, kind: input, shape index: {}]
  %s5 = inlined_call_operand.vmem [shape: bf16[16,16], index: 5, kind: input, shape index: {}]
  %s6 = inlined_call_operand.vmem [shape: f32[16,1], index: 6, kind: input, shape index: {}]
  %s7 = inlined_call_operand.hbm [shape: f32[2,16,64], index: 7, kind: output, shape index: {}]
  %s8 = sld [smem:[#allocation0]]
  $region61: #{tpu_custom_call.1} parent=0
    _
  %s10 = ssub.s32 1, %s8
  %s11 = scalar_select 0, %s10, %s8
  $region1: #{tpu_custom_call.1} parent=0
    #allocation2 [shape = 'u8[16384]{0}', space=vmem, size = 0x4000, scoped, tag = 'output window, operand 0']
    #allocation3 [shape = 's32[2]{0}', space=sflag, size = 0x8, scoped, tag = 'scoped memory for tpu_custom_call.1']
    %12 = vsyncpa [#allocation3], 0
    %s13 = scalar_lea.sflag [#allocation3], 1
    %14 = vsyncpa %s13, 0
    loop: start=0, step=1, limit=4
    $region2: #{tpu_custom_call.1} parent=1 // loop_pre_header
      _
    $region3: #{tpu_custom_call.1} parent=1 // loop_header
      %s16 = sphi 0, %s20
      %p17 = scmp.ge.s32.totalorder %s16, 4
      %s23 = sphi 0, %s35
      %s24 = sphi 0, %s31
      %s25 = sphi 0, %s23
      %s26 = sphi 0, %s24
      %s27 = sphi 0, %s25
      %s28 = sphi 0, %s26
      %s40 = sphi 0, %s42
      %s43 = sphi 0, %s40
      %s44 = sphi 0, %s43
      %s60 = sphi 0, %s44
      %s66 = sphi 0, %s68
      %s69 = sphi 0, %s66
      %s70 = sphi 0, %s69
      %s86 = sphi 0, %s70
      %s90 = sphi 0, %s90
      %s92 = sphi 0, %s90
      %s93 = sphi 0, %s92
      %s107 = sphi 0, %s93
      %s111 = sphi 0, %s111
      %s113 = sphi 0, %s111
      %s114 = sphi 0, %s113
      %s128 = sphi 0, %s114
      %s132 = sphi 0, %s132
      %s134 = sphi 0, %s132
      %s135 = sphi 0, %s134
      %s149 = sphi 0, %s135
      %s153 = sphi 0, %s153
      %s155 = sphi 0, %s153
      %s156 = sphi 0, %s155
      %s170 = sphi 0, %s156
      %s174 = sphi 0, %s174
      %s176 = sphi 0, %s174
      %s177 = sphi 0, %s176
      %s191 = sphi 0, %s177
      %s199 = sphi 0, %s201
      %s202 = sphi 0, %s199
      %s203 = sphi 0, %s202
      %s219 = sphi 0, %s203
    $region4: #{tpu_custom_call.1} parent=1 // loop_header_branch
      %19 = sbr.rel (%p17) target = $region8
    $region5: #{tpu_custom_call.1} parent=1 // loop_body
      %s21 = ssub.s32 %s16, 1
      %s22 = ssub.s32 %s16, 2
      %s29 = sadd.s32 1, %s24
      %p30 = scmp.ge.s32.totalorder %s29, 1
      %s31 = scalar_select %p30, 0, %s29
      %s32 = sadd.s32 1, %s23
      %s33 = scalar_select %p30, %s32, %s23
      %p34 = scmp.ge.s32.totalorder %s33, 2
      %s35 = scalar_select %p34, 0, %s33
      %s36 = ssub.s32 %s23, %s35
      %s37 = ssub.s32 %s24, %s31
      %s38 = sor.u32 %s36, %s37
      %p39 = scmp.eq.s32.totalorder %s38, 0
      %s41 = sadd.s32 %s40, 1
      %s42 = scalar_select %p39, %s40, %s41
      %p45 = pneg %p39
      %p46 = scmp.eq.s32.totalorder %s16, 1
      %p47 = por %p45, %p46
      %p48 = scmp.ne.s32.totalorder %s40, %s43
      %p49 = scmp.eq.s32.totalorder %s16, 0
      %p50 = por %p48, %p49
      %p51 = scmp.ne.s32.totalorder %s40, %s43
      %p52 = scmp.eq.s32.totalorder %s21, 1
      %p53 = por %p51, %p52
      %p54 = scmp.ne.s32.totalorder %s43, %s44
      %p55 = scmp.eq.s32.totalorder %s21, 0
      %p56 = por %p54, %p55
      %p57 = scmp.ne.s32.totalorder %s43, %s44
      %p58 = scmp.eq.s32.totalorder %s22, 1
      %p59 = por %p57, %p58
      %p61 = scmp.ne.s32.totalorder %s44, %s60
      %p62 = scmp.eq.s32.totalorder %s22, 0
      %p63 = por %p61, %p62
      %s64 = ssub.s32 %s23, %s35
      %p65 = scmp.eq.s32.totalorder %s64, 0
      %s67 = sadd.s32 %s66, 1
      %s68 = scalar_select %p65, %s66, %s67
      %p71 = pneg %p65
      %p72 = scmp.eq.s32.totalorder %s16, 1
      %p73 = por %p71, %p72
      %p74 = scmp.ne.s32.totalorder %s66, %s69
      %p75 = scmp.eq.s32.totalorder %s16, 0
      %p76 = por %p74, %p75
      %p77 = scmp.ne.s32.totalorder %s66, %s69
      %p78 = scmp.eq.s32.totalorder %s21, 1
      %p79 = por %p77, %p78
      %p80 = scmp.ne.s32.totalorder %s69, %s70
      %p81 = scmp.eq.s32.totalorder %s21, 0
      %p82 = por %p80, %p81
      %p83 = scmp.ne.s32.totalorder %s69, %s70
      %p84 = scmp.eq.s32.totalorder %s22, 1
      %p85 = por %p83, %p84
      %p87 = scmp.ne.s32.totalorder %s70, %s86
      %p88 = scmp.eq.s32.totalorder %s22, 0
      %p89 = por %p87, %p88
      %s91 = sadd.s32 %s90, 1
      %p94 = scmp.eq.s32.totalorder %s16, 1
      %p95 = scmp.ne.s32.totalorder %s90, %s92
      %p96 = scmp.eq.s32.totalorder %s16, 0
      %p97 = por %p95, %p96
      %p98 = scmp.ne.s32.totalorder %s90, %s92
      %p99 = scmp.eq.s32.totalorder %s21, 1
      %p100 = por %p98, %p99
      %p101 = scmp.ne.s32.totalorder %s92, %s93
      %p102 = scmp.eq.s32.totalorder %s21, 0
      %p103 = por %p101, %p102
      %p104 = scmp.ne.s32.totalorder %s92, %s93
      %p105 = scmp.eq.s32.totalorder %s22, 1
      %p106 = por %p104, %p105
      %p108 = scmp.ne.s32.totalorder %s93, %s107
      %p109 = scmp.eq.s32.totalorder %s22, 0
      %p110 = por %p108, %p109
      %s112 = sadd.s32 %s111, 1
      %p115 = scmp.eq.s32.totalorder %s16, 1
      %p116 = scmp.ne.s32.totalorder %s111, %s113
      %p117 = scmp.eq.s32.totalorder %s16, 0
      %p118 = por %p116, %p117
      %p119 = scmp.ne.s32.totalorder %s111, %s113
      %p120 = scmp.eq.s32.totalorder %s21, 1
      %p121 = por %p119, %p120
      %p122 = scmp.ne.s32.totalorder %s113, %s114
      %p123 = scmp.eq.s32.totalorder %s21, 0
      %p124 = por %p122, %p123
      %p125 = scmp.ne.s32.totalorder %s113, %s114
      %p126 = scmp.eq.s32.totalorder %s22, 1
      %p127 = por %p125, %p126
      %p129 = scmp.ne.s32.totalorder %s114, %s128
      %p130 = scmp.eq.s32.totalorder %s22, 0
      %p131 = por %p129, %p130
      %s133 = sadd.s32 %s132, 1
      %p136 = scmp.eq.s32.totalorder %s16, 1
      %p137 = scmp.ne.s32.totalorder %s132, %s134
      %p138 = scmp.eq.s32.totalorder %s16, 0
      %p139 = por %p137, %p138
      %p140 = scmp.ne.s32.totalorder %s132, %s134
      %p141 = scmp.eq.s32.totalorder %s21, 1
      %p142 = por %p140, %p141
      %p143 = scmp.ne.s32.totalorder %s134, %s135
      %p144 = scmp.eq.s32.totalorder %s21, 0
      %p145 = por %p143, %p144
      %p146 = scmp.ne.s32.totalorder %s134, %s135
      %p147 = scmp.eq.s32.totalorder %s22, 1
      %p148 = por %p146, %p147
      %p150 = scmp.ne.s32.totalorder %s135, %s149
      %p151 = scmp.eq.s32.totalorder %s22, 0
      %p152 = por %p150, %p151
      %s154 = sadd.s32 %s153, 1
      %p157 = scmp.eq.s32.totalorder %s16, 1
      %p158 = scmp.ne.s32.totalorder %s153, %s155
      %p159 = scmp.eq.s32.totalorder %s16, 0
      %p160 = por %p158, %p159
      %p161 = scmp.ne.s32.totalorder %s153, %s155
      %p162 = scmp.eq.s32.totalorder %s21, 1
      %p163 = por %p161, %p162
      %p164 = scmp.ne.s32.totalorder %s155, %s156
      %p165 = scmp.eq.s32.totalorder %s21, 0
      %p166 = por %p164, %p165
      %p167 = scmp.ne.s32.totalorder %s155, %s156
      %p168 = scmp.eq.s32.totalorder %s22, 1
      %p169 = por %p167, %p168
      %p171 = scmp.ne.s32.totalorder %s156, %s170
      %p172 = scmp.eq.s32.totalorder %s22, 0
      %p173 = por %p171, %p172
      %s175 = sadd.s32 %s174, 1
      %p178 = scmp.eq.s32.totalorder %s16, 1
      %p179 = scmp.ne.s32.totalorder %s174, %s176
      %p180 = scmp.eq.s32.totalorder %s16, 0
      %p181 = por %p179, %p180
      %p182 = scmp.ne.s32.totalorder %s174, %s176
      %p183 = scmp.eq.s32.totalorder %s21, 1
      %p184 = por %p182, %p183
      %p185 = scmp.ne.s32.totalorder %s176, %s177
      %p186 = scmp.eq.s32.totalorder %s21, 0
      %p187 = por %p185, %p186
      %p188 = scmp.ne.s32.totalorder %s176, %s177
      %p189 = scmp.eq.s32.totalorder %s22, 1
      %p190 = por %p188, %p189
      %p192 = scmp.ne.s32.totalorder %s177, %s191
      %p193 = scmp.eq.s32.totalorder %s22, 0
      %p194 = por %p192, %p193
      %s195 = ssub.s32 %s23, %s35
      %s196 = ssub.s32 %s24, %s31
      %s197 = sor.u32 %s195, %s196
      %p198 = scmp.eq.s32.totalorder %s197, 0
      %s200 = sadd.s32 %s199, 1
      %s201 = scalar_select %p198, %s199, %s200
      %p204 = pneg %p198
      %p205 = scmp.eq.s32.totalorder %s16, 1
      %p206 = por %p204, %p205
      %p207 = scmp.ne.s32.totalorder %s199, %s202
      %p208 = scmp.eq.s32.totalorder %s16, 0
      %p209 = por %p207, %p208
      %p210 = scmp.ne.s32.totalorder %s199, %s202
      %p211 = scmp.eq.s32.totalorder %s21, 1
      %p212 = por %p210, %p211
      %p213 = scmp.ne.s32.totalorder %s202, %s203
      %p214 = scmp.eq.s32.totalorder %s21, 0
      %p215 = por %p213, %p214
      %p216 = scmp.ne.s32.totalorder %s202, %s203
      %p217 = scmp.eq.s32.totalorder %s22, 1
      %p218 = por %p216, %p217
      %p220 = scmp.ne.s32.totalorder %s203, %s219
      %p221 = scmp.eq.s32.totalorder %s22, 0
      %p222 = por %p220, %p221
      %p223 = scmp.le.s32.totalorder 1, %s16
      %p224 = scmp.lt.s32.totalorder %s16, 3
      %p225 = pnand %p223, %p224
      %p226 = pneg %p225
      // Predicated region
      $region9: #{tpu_custom_call.1} parent=5 // pred_check
        _
      $region10: #{tpu_custom_call.1} parent=5 // pred_check_branch
        %228 = sbr.rel (%p225) target = $region12
      $region11: #{tpu_custom_call.1} parent=5 // pred_region
        %s229 = ssub.s32 %s16, 1
        // Predicated region
        $region13: #{tpu_custom_call.1} parent=11 // pred_check
          %p230 = pneg %p103
        $region14: #{tpu_custom_call.1} parent=11 // pred_check_branch
          %232 = sbr.rel (%p230) target = $region16
        $region15: #{tpu_custom_call.1} parent=11 // pred_region
          _
        $region16: #{tpu_custom_call.1} parent=11 // pred_fallthru
          _
        // Predicated region
        $region17: #{tpu_custom_call.1} parent=11 // pred_check
          %p233 = pneg %p124
        $region18: #{tpu_custom_call.1} parent=11 // pred_check_branch
          %235 = sbr.rel (%p233) target = $region20
        $region19: #{tpu_custom_call.1} parent=11 // pred_region
          _
        $region20: #{tpu_custom_call.1} parent=11 // pred_fallthru
          _
        // Predicated region
        $region21: #{tpu_custom_call.1} parent=11 // pred_check
          %p236 = pneg %p145
        $region22: #{tpu_custom_call.1} parent=11 // pred_check_branch
          %238 = sbr.rel (%p236) target = $region24
        $region23: #{tpu_custom_call.1} parent=11 // pred_region
          _
        $region24: #{tpu_custom_call.1} parent=11 // pred_fallthru
          _
        // Predicated region
        $region25: #{tpu_custom_call.1} parent=11 // pred_check
          %p239 = pneg %p166
        $region26: #{tpu_custom_call.1} parent=11 // pred_check_branch
          %241 = sbr.rel (%p239) target = $region28
        $region27: #{tpu_custom_call.1} parent=11 // pred_region
          _
        $region28: #{tpu_custom_call.1} parent=11 // pred_fallthru
          _
        // Predicated region
        $region29: #{tpu_custom_call.1} parent=11 // pred_check
          %p242 = pneg %p187
        $region30: #{tpu_custom_call.1} parent=11 // pred_check_branch
          %244 = sbr.rel (%p242) target = $region32
        $region31: #{tpu_custom_call.1} parent=11 // pred_region
          _
        $region32: #{tpu_custom_call.1} parent=11 // pred_fallthru
          _
      $region12: #{tpu_custom_call.1} parent=5 // pred_fallthru
        _
      %p245 = scmp.lt.s32.totalorder %s16, 2
      // Predicated region
      $region33: #{tpu_custom_call.1} parent=5 // pred_check
        %p246 = pneg %p245
      $region34: #{tpu_custom_call.1} parent=5 // pred_check_branch
        %248 = sbr.rel (%p246) target = $region36
      $region35: #{tpu_custom_call.1} parent=5 // pred_region
        // Predicated region
        $region37: #{tpu_custom_call.1} parent=35 // pred_check
          %p249 = pneg %p50
        $region38: #{tpu_custom_call.1} parent=35 // pred_check_branch
          %251 = sbr.rel (%p249) target = $region40
        $region39: #{tpu_custom_call.1} parent=35 // pred_region
          %p252 = scmp.lt.s32.totalorder %s23, 1
          %s253 = scalar_select %p252, %s23, 1
          %p254 = scmp.lt.s32.totalorder %s24, 0
          %s255 = scalar_select %p254, %s24, 0
          %s256 = sadd.s32 %s255, %s253
          %s257 = smul.addr %s256, 4
          %s258 = scalar_lea.vmem %s0, %s257
        $region40: #{tpu_custom_call.1} parent=35 // pred_fallthru
          _
        // Predicated region
        $region41: #{tpu_custom_call.1} parent=35 // pred_check
          %p259 = pneg %p76
        $region42: #{tpu_custom_call.1} parent=35 // pred_check_branch
          %261 = sbr.rel (%p259) target = $region44
        $region43: #{tpu_custom_call.1} parent=35 // pred_region
          %p262 = scmp.lt.s32.totalorder %s23, 1
          %s263 = scalar_select %p262, %s23, 1
          %s264 = smul.addr %s263, 4
          %s265 = scalar_lea.vmem %s1, %s264
        $region44: #{tpu_custom_call.1} parent=35 // pred_fallthru
          _
      $region36: #{tpu_custom_call.1} parent=5 // pred_fallthru
        _
      %p266 = scmp.le.s32.totalorder 1, %s16
      %p267 = scmp.lt.s32.totalorder %s16, 3
      %p268 = pnand %p266, %p267
      %p269 = pneg %p268
      // Predicated region
      $region45: #{tpu_custom_call.1} parent=5 // pred_check
        _
      $region46: #{tpu_custom_call.1} parent=5 // pred_check_branch
        %271 = sbr.rel (%p268) target = $region48
      $region47: #{tpu_custom_call.1} parent=5 // pred_region
        %s272 = ssub.s32 %s16, 1
        %p273 = scmp.lt.s32.totalorder %s25, 1
        %s274 = scalar_select %p273, %s25, 1
        %p275 = scmp.lt.s32.totalorder %s26, 0
        %s276 = scalar_select %p275, %s26, 0
        %s277 = sadd.s32 %s276, %s274
        %s278 = smul.addr %s277, 4
        %s279 = scalar_lea.vmem %s0, %s278
        %p280 = pneg %p56
        %p281 = pneg %p53
        %p282 = scmp.lt.s32.totalorder %s25, 1
        %s283 = scalar_select %p282, %s25, 1
        %s284 = smul.addr %s283, 4
        %s285 = scalar_lea.vmem %s1, %s284
        %p286 = pneg %p82
        %p287 = pneg %p79
        %p288 = pneg %p103
        %p289 = pneg %p100
        %p290 = pneg %p124
        %p291 = pneg %p121
        %p292 = pneg %p145
        %p293 = pneg %p142
        %p294 = pneg %p166
        %p295 = pneg %p163
        %p296 = pneg %p187
        %p297 = pneg %p184
        %p298 = pneg %p215
        %p299 = pneg %p212
        %s300 = sand.u32 %s202, 1
        %s301 = scalar_lea.sflag [#allocation3], %s300
        %s302 = sand.u32 %s202, 1
        %s303 = smul.addr %s302, 16
        %s304 = scalar_lea.vmem [#allocation2], %s303
        %p305 = scmp.lt.s32.totalorder %s25, 1
        %s306 = scalar_select %p305, %s25, 1
        %p307 = scmp.lt.s32.totalorder %s26, 0
        %s308 = scalar_select %p307, %s26, 0
        %s309 = sadd.s32 %s308, %s306
        %s310 = smul.addr %s309, 4
        %s311 = scalar_lea.vmem %s0, %s310
        %p312 = scmp.lt.s32.totalorder %s25, 1
        %s313 = scalar_select %p312, %s25, 1
        %s314 = smul.addr %s313, 4
        %s315 = scalar_lea.vmem %s1, %s314
        %v317 = vld [vmem:[%s2] sm:$0xf]
        %v318 = vld [vmem:[%s2 + $0x4] sm:$0xf]
        %v319 = vld [vmem:[%s3] sm:$0xf]
        %v320 = vld [vmem:[%s3 + $0x4] sm:$0xf]
        %v321 = vld [vmem:[%s4] sm:$0xff]
        %v322 = vld [vmem:[%s4 + $0x8] sm:$0xff]
        %v323 = vld [vmem:[%s5] sm:$0xf]
        %v324 = vld [vmem:[%s5 + $0x4] sm:$0xf]
        %v325 = vld [vmem:[%s6] sm:$0xff]
        %v326 = vld [vmem:[%s6 + $0x8] sm:$0xff]
        %v327 = vld [vmem:[%s311] sm:$0x7]
        %v328 = vld [vmem:[%s315] sm:$0x7]
        %v329 = vmul.f32 %v327, %v327
        %330 = vxpose.xlu0.b32.start [1/16] %v329, 128
        %331 = vxpose.xlu0.b32.cont [2/16] 0.0, 128
        %332 = vxpose.xlu0.b32.cont [3/16] 0.0, 128
        %333 = vxpose.xlu0.b32.cont [4/16] 0.0, 128
        %334 = vxpose.xlu0.b32.cont [5/16] 0.0, 128
        %335 = vxpose.xlu0.b32.cont [6/16] 0.0, 128
        %336 = vxpose.xlu0.b32.cont [7/16] 0.0, 128
        %337 = vxpose.xlu0.b32.cont [8/16] 0.0, 128
        %338 = vxpose.xlu0.b32.cont [9/16] 0.0, 128
        %339 = vxpose.xlu0.b32.cont [10/16] 0.0, 128
        %340 = vxpose.xlu0.b32.cont [11/16] 0.0, 128
        %341 = vxpose.xlu0.b32.cont [12/16] 0.0, 128
        %342 = vxpose.xlu0.b32.cont [13/16] 0.0, 128
        %343 = vxpose.xlu0.b32.cont [14/16] 0.0, 128
        %344 = vxpose.xlu0.b32.cont [15/16] 0.0, 128
        %345 = vxpose.xlu0.b32.end [16/16] 0.0, 128
        %v346 = vpop.trf.xlu0
        %v347 = vpop.trf.xlu0
        %v348 = vpop.trf.xlu0
        %v349 = vpop.trf.xlu0
        %v350 = vpop.trf.xlu0
        %v351 = vpop.trf.xlu0
        %v352 = vpop.trf.xlu0
        %v353 = vpop.trf.xlu0
        %v354 = vpop.trf.xlu0
        %v355 = vpop.trf.xlu0
        %v356 = vpop.trf.xlu0
        %v357 = vpop.trf.xlu0
        %v358 = vpop.trf.xlu0
        %v359 = vpop.trf.xlu0
        %v360 = vpop.trf.xlu0
        %v361 = vpop.trf.xlu0
        %vm362 = vcmask 23552
        %v364 = vsel %vm362, %v346, 0
        %v367 = vsel %vm362, %v347, 0
        %v370 = vsel %vm362, %v348, 0
        %v373 = vsel %vm362, %v349, 0
        %v376 = vsel %vm362, %v350, 0
        %v379 = vsel %vm362, %v351, 0
        %v382 = vsel %vm362, %v352, 0
        %v385 = vsel %vm362, %v353, 0
        %vm387 = vcmask 1042432
        %v389 = vsel %vm387, 1.0, 0
        %391 = vmatprep.subr.mxu0 0.0
        %392 = vmatpush1.msra.mxu0 0.0
        %393 = vmatprep.subr.mxu0 0.0
        %394 = vmatpush1.msra.mxu0 0.0
        %395 = vmatprep.subr.mxu0 0.0
        %396 = vmatpush1.msra.mxu0 0.0
        %397 = vmatprep.subr.mxu0 0.0
        %398 = vmatpush1.msra.mxu0 0.0
        %399 = vmatprep.subr.mxu0 0.0
        %400 = vmatpush1.msra.mxu0 0.0
        %401 = vmatprep.subr.mxu0 0.0
        %402 = vmatpush1.msra.mxu0 0.0
        %403 = vmatprep.subr.mxu0 0.0
        %404 = vmatpush1.msra.mxu0 0.0
        %405 = vmatprep.subr.mxu0 0.0
        %406 = vmatpush1.msra.mxu0 0.0
        %407 = vmatprep.subr.mxu0 0.0
        %408 = vmatpush1.msra.mxu0 0.0
        %409 = vmatprep.subr.mxu0 0.0
        %410 = vmatpush1.msra.mxu0 0.0
        %411 = vmatprep.subr.mxu0 0.0
        %412 = vmatpush1.msra.mxu0 0.0
        %413 = vmatprep.subr.mxu0 0.0
        %414 = vmatpush1.msra.mxu0 0.0
        %415 = vmatprep.subr.mxu0 0.0
        %416 = vmatpush1.msra.mxu0 0.0
        %417 = vmatprep.subr.mxu0 0.0
        %418 = vmatpush1.msra.mxu0 0.0
        %419 = vmatprep.subr.mxu0 0.0
        %420 = vmatpush1.msra.mxu0 0.0
        %421 = vmatprep.subr.mxu0 0.0
        %422 = vmatpush1.msra.mxu0 %v389
        %423 = vmatprep.subr.mxu0 0.0
        %424 = vmatpush2.msra.mxu0 0.0
        %425 = vmatprep.subr.mxu0 0.0
        %426 = vmatpush2.msra.mxu0 0.0
        %427 = vmatprep.subr.mxu0 0.0
        %428 = vmatpush2.msra.mxu0 0.0
        %429 = vmatprep.subr.mxu0 0.0
        %430 = vmatpush2.msra.mxu0 0.0
        %431 = vmatprep.subr.mxu0 0.0
        %432 = vmatpush2.msra.mxu0 0.0
        %433 = vmatprep.subr.mxu0 0.0
        %434 = vmatpush2.msra.mxu0 0.0
        %435 = vmatprep.subr.mxu0 0.0
        %436 = vmatpush2.msra.mxu0 0.0
        %437 = vmatprep.subr.mxu0 0.0
        %438 = vmatpush2.msra.mxu0 0.0
        %439 = vmatprep.subr.mxu0 0.0
        %440 = vmatpush2.msra.mxu0 0.0
        %441 = vmatprep.subr.mxu0 0.0
        %442 = vmatpush2.msra.mxu0 0.0
        %443 = vmatprep.subr.mxu0 0.0
        %444 = vmatpush2.msra.mxu0 0.0
        %445 = vmatprep.subr.mxu0 0.0
        %446 = vmatpush2.msra.mxu0 0.0
        %447 = vmatprep.subr.mxu0 0.0
        %448 = vmatpush2.msra.mxu0 0.0
        %449 = vmatprep.subr.mxu0 0.0
        %450 = vmatpush2.msra.mxu0 0.0
        %451 = vmatprep.subr.mxu0 0.0
        %452 = vmatpush2.msra.mxu0 0.0
        %453 = vmatprep.subr.mxu0 0.0
        %454 = vmatpush2.msra.mxu0 0.0
        %455 = vmatprep.mubr.f32.mxu0 0.0
        %456 = vmatmul.mubr.f32.gmra.mxu0 %v364
        %v457 = vpop.f32.mrf.mxu0
        %v458 = vadd.f32 0.0, %v457
        %v459 = vpop.f32.mrf.mxu0
        %460 = vmatprep.mubr.f32.mxu0 0.0
        %461 = vmatmul.mubr.f32.gmra.mxu0 %v367
        %v462 = vpop.f32.mrf.mxu0
        %v463 = vadd.f32 0.0, %v462
        %v464 = vpop.f32.mrf.mxu0
        %465 = vmatprep.mubr.f32.mxu0 0.0
        %466 = vmatmul.mubr.f32.gmra.mxu0 %v370
        %v467 = vpop.f32.mrf.mxu0
        %v468 = vadd.f32 0.0, %v467
        %v469 = vpop.f32.mrf.mxu0
        %470 = vmatprep.mubr.f32.mxu0 0.0
        %471 = vmatmul.mubr.f32.gmra.mxu0 %v373
        %v472 = vpop.f32.mrf.mxu0
        %v473 = vadd.f32 0.0, %v472
        %v474 = vpop.f32.mrf.mxu0
        %475 = vmatprep.mubr.f32.mxu0 0.0
        %476 = vmatmul.mubr.f32.gmra.mxu0 %v376
        %v477 = vpop.f32.mrf.mxu0
        %v478 = vadd.f32 0.0, %v477
        %v479 = vpop.f32.mrf.mxu0
        %480 = vmatprep.mubr.f32.mxu0 0.0
        %481 = vmatmul.mubr.f32.gmra.mxu0 %v379
        %v482 = vpop.f32.mrf.mxu0
        %v483 = vadd.f32 0.0, %v482
        %v484 = vpop.f32.mrf.mxu0
        %485 = vmatprep.mubr.f32.mxu0 0.0
        %486 = vmatmul.mubr.f32.gmra.mxu0 %v382
        %v487 = vpop.f32.mrf.mxu0
        %v488 = vadd.f32 0.0, %v487
        %v489 = vpop.f32.mrf.mxu0
        %490 = vmatprep.mubr.f32.mxu0 0.0
        %491 = vmatmul.mubr.f32.gmra.mxu0 %v385
        %v492 = vpop.f32.mrf.mxu0
        %v493 = vadd.f32 0.0, %v492
        %v494 = vpop.f32.mrf.mxu0
        %495 = vdwg.mxu0
        %v496 = vmul.f32 %v328, %v328
        %vm497 = vcmask 518144
        %v498 = vsel %vm497, %v496, 0.0
        %v499 = vrot.slane %v498, 4
        %v500 = vadd.f32 %v498, %v499
        %v501 = vrot.slane %v500, 2
        %v502 = vadd.f32 %v500, %v501
        %v503 = vrot.slane %v502, 1
        %v504 = vadd.f32 %v502, %v503
        %505 = vxpose.xlu0.b32.start [1/16] %v327, 128
        %506 = vxpose.xlu0.b32.cont [2/16] 0.0, 128
        %507 = vxpose.xlu0.b32.cont [3/16] 0.0, 128
        %508 = vxpose.xlu0.b32.cont [4/16] 0.0, 128
        %509 = vxpose.xlu0.b32.cont [5/16] 0.0, 128
        %510 = vxpose.xlu0.b32.cont [6/16] 0.0, 128
        %511 = vxpose.xlu0.b32.cont [7/16] 0.0, 128
        %512 = vxpose.xlu0.b32.cont [8/16] 0.0, 128
        %513 = vxpose.xlu0.b32.cont [9/16] 0.0, 128
        %514 = vxpose.xlu0.b32.cont [10/16] 0.0, 128
        %515 = vxpose.xlu0.b32.cont [11/16] 0.0, 128
        %516 = vxpose.xlu0.b32.cont [12/16] 0.0, 128
        %517 = vxpose.xlu0.b32.cont [13/16] 0.0, 128
        %518 = vxpose.xlu0.b32.cont [14/16] 0.0, 128
        %519 = vxpose.xlu0.b32.cont [15/16] 0.0, 128
        %520 = vxpose.xlu0.b32.end [16/16] 0.0, 128
        %v521 = vpop.trf.xlu0
        %v522 = vpop.trf.xlu0
        %v523 = vpop.trf.xlu0
        %v524 = vpop.trf.xlu0
        %v525 = vpop.trf.xlu0
        %v526 = vpop.trf.xlu0
        %v527 = vpop.trf.xlu0
        %v528 = vpop.trf.xlu0
        %v529 = vpop.trf.xlu0
        %v530 = vpop.trf.xlu0
        %v531 = vpop.trf.xlu0
        %v532 = vpop.trf.xlu0
        %v533 = vpop.trf.xlu0
        %v534 = vpop.trf.xlu0
        %v535 = vpop.trf.xlu0
        %v536 = vpop.trf.xlu0
        %v538 = vsel %vm362, %v521, 0
        %v541 = vsel %vm362, %v522, 0
        %v544 = vsel %vm362, %v523, 0
        %v547 = vsel %vm362, %v524, 0
        %v550 = vsel %vm362, %v525, 0
        %v553 = vsel %vm362, %v526, 0
        %v556 = vsel %vm362, %v527, 0
        %v559 = vsel %vm362, %v528, 0
        %v562 = vsel %vm387, %v328, 0
        %564 = vmatprep.subr.mxu0 0.0
        %565 = vmatpush1.msra.mxu0 0.0
        %566 = vmatprep.subr.mxu0 0.0
        %567 = vmatpush1.msra.mxu0 0.0
        %568 = vmatprep.subr.mxu0 0.0
        %569 = vmatpush1.msra.mxu0 0.0
        %570 = vmatprep.subr.mxu0 0.0
        %571 = vmatpush1.msra.mxu0 0.0
        %572 = vmatprep.subr.mxu0 0.0
        %573 = vmatpush1.msra.mxu0 0.0
        %574 = vmatprep.subr.mxu0 0.0
        %575 = vmatpush1.msra.mxu0 0.0
        %576 = vmatprep.subr.mxu0 0.0
        %577 = vmatpush1.msra.mxu0 0.0
        %578 = vmatprep.subr.mxu0 0.0
        %579 = vmatpush1.msra.mxu0 0.0
        %580 = vmatprep.subr.mxu0 0.0
        %581 = vmatpush1.msra.mxu0 0.0
        %582 = vmatprep.subr.mxu0 0.0
        %583 = vmatpush1.msra.mxu0 0.0
        %584 = vmatprep.subr.mxu0 0.0
        %585 = vmatpush1.msra.mxu0 0.0
        %586 = vmatprep.subr.mxu0 0.0
        %587 = vmatpush1.msra.mxu0 0.0
        %588 = vmatprep.subr.mxu0 0.0
        %589 = vmatpush1.msra.mxu0 0.0
        %590 = vmatprep.subr.mxu0 0.0
        %591 = vmatpush1.msra.mxu0 0.0
        %592 = vmatprep.subr.mxu0 0.0
        %593 = vmatpush1.msra.mxu0 0.0
        %594 = vmatprep.subr.mxu0 0.0
        %595 = vmatpush1.msra.mxu0 %v562
        %596 = vmatprep.subr.mxu0 0.0
        %597 = vmatpush2.msra.mxu0 0.0
        %598 = vmatprep.subr.mxu0 0.0
        %599 = vmatpush2.msra.mxu0 0.0
        %600 = vmatprep.subr.mxu0 0.0
        %601 = vmatpush2.msra.mxu0 0.0
        %602 = vmatprep.subr.mxu0 0.0
        %603 = vmatpush2.msra.mxu0 0.0
        %604 = vmatprep.subr.mxu0 0.0
        %605 = vmatpush2.msra.mxu0 0.0
        %606 = vmatprep.subr.mxu0 0.0
        %607 = vmatpush2.msra.mxu0 0.0
        %608 = vmatprep.subr.mxu0 0.0
        %609 = vmatpush2.msra.mxu0 0.0
        %610 = vmatprep.subr.mxu0 0.0
        %611 = vmatpush2.msra.mxu0 0.0
        %612 = vmatprep.subr.mxu0 0.0
        %613 = vmatpush2.msra.mxu0 0.0
        %614 = vmatprep.subr.mxu0 0.0
        %615 = vmatpush2.msra.mxu0 0.0
        %616 = vmatprep.subr.mxu0 0.0
        %617 = vmatpush2.msra.mxu0 0.0
        %618 = vmatprep.subr.mxu0 0.0
        %619 = vmatpush2.msra.mxu0 0.0
        %620 = vmatprep.subr.mxu0 0.0
        %621 = vmatpush2.msra.mxu0 0.0
        %622 = vmatprep.subr.mxu0 0.0
        %623 = vmatpush2.msra.mxu0 0.0
        %624 = vmatprep.subr.mxu0 0.0
        %625 = vmatpush2.msra.mxu0 0.0
        %626 = vmatprep.subr.mxu0 0.0
        %627 = vmatpush2.msra.mxu0 0.0
        %628 = vmatprep.mubr.f32.mxu0 0.0
        %629 = vmatmul.mubr.f32.gmra.mxu0 %v538
        %v630 = vpop.f32.mrf.mxu0
        %v631 = vadd.f32 0.0, %v630
        %v632 = vpop.f32.mrf.mxu0
        %633 = vmatprep.mubr.f32.mxu0 0.0
        %634 = vmatmul.mubr.f32.gmra.mxu0 %v541
        %v635 = vpop.f32.mrf.mxu0
        %v636 = vadd.f32 0.0, %v635
        %v637 = vpop.f32.mrf.mxu0
        %638 = vmatprep.mubr.f32.mxu0 0.0
        %639 = vmatmul.mubr.f32.gmra.mxu0 %v544
        %v640 = vpop.f32.mrf.mxu0
        %v641 = vadd.f32 0.0, %v640
        %v642 = vpop.f32.mrf.mxu0
        %643 = vmatprep.mubr.f32.mxu0 0.0
        %644 = vmatmul.mubr.f32.gmra.mxu0 %v547
        %v645 = vpop.f32.mrf.mxu0
        %v646 = vadd.f32 0.0, %v645
        %v647 = vpop.f32.mrf.mxu0
        %648 = vmatprep.mubr.f32.mxu0 0.0
        %649 = vmatmul.mubr.f32.gmra.mxu0 %v550
        %v650 = vpop.f32.mrf.mxu0
        %v651 = vadd.f32 0.0, %v650
        %v652 = vpop.f32.mrf.mxu0
        %653 = vmatprep.mubr.f32.mxu0 0.0
        %654 = vmatmul.mubr.f32.gmra.mxu0 %v553
        %v655 = vpop.f32.mrf.mxu0
        %v656 = vadd.f32 0.0, %v655
        %v657 = vpop.f32.mrf.mxu0
        %658 = vmatprep.mubr.f32.mxu0 0.0
        %659 = vmatmul.mubr.f32.gmra.mxu0 %v556
        %v660 = vpop.f32.mrf.mxu0
        %v661 = vadd.f32 0.0, %v660
        %v662 = vpop.f32.mrf.mxu0
        %663 = vmatprep.mubr.f32.mxu0 0.0
        %664 = vmatmul.mubr.f32.gmra.mxu0 %v559
        %v665 = vpop.f32.mrf.mxu0
        %v666 = vadd.f32 0.0, %v665
        %v667 = vpop.f32.mrf.mxu0
        %668 = vdwg.mxu0
        %670 = vset.pattern.permute.xlu0 0
        %671 = vperm.xlu0 %670, %v458
        %v672 = vpop.permute.xlu0 %671
        %675 = vset.pattern.permute.xlu0 0
        %676 = vperm.xlu0 %675, %v463
        %v677 = vpop.permute.xlu0 %676
        %680 = vset.pattern.permute.xlu0 0
        %681 = vperm.xlu0 %680, %v468
        %v682 = vpop.permute.xlu0 %681
        %685 = vset.pattern.permute.xlu0 0
        %686 = vperm.xlu0 %685, %v473
        %v687 = vpop.permute.xlu0 %686
        %690 = vset.pattern.permute.xlu0 0
        %691 = vperm.xlu0 %690, %v478
        %v692 = vpop.permute.xlu0 %691
        %695 = vset.pattern.permute.xlu0 0
        %696 = vperm.xlu0 %695, %v483
        %v697 = vpop.permute.xlu0 %696
        %700 = vset.pattern.permute.xlu0 0
        %701 = vperm.xlu0 %700, %v488
        %v702 = vpop.permute.xlu0 %701
        %705 = vset.pattern.permute.xlu0 0
        %706 = vperm.xlu0 %705, %v493
        %v707 = vpop.permute.xlu0 %706
        %v709 = vadd.f32 %v672, %v504
        %v710 = vadd.f32 %v677, %v504
        %v711 = vadd.f32 %v682, %v504
        %v712 = vadd.f32 %v687, %v504
        %v713 = vadd.f32 %v692, %v504
        %v714 = vadd.f32 %v697, %v504
        %v715 = vadd.f32 %v702, %v504
        %v716 = vadd.f32 %v707, %v504
        %v717 = vmul.f32 %v631, 2.0
        %v718 = vmul.f32 %v636, 2.0
        %v719 = vmul.f32 %v641, 2.0
        %v720 = vmul.f32 %v646, 2.0
        %v721 = vmul.f32 %v651, 2.0
        %v722 = vmul.f32 %v656, 2.0
        %v723 = vmul.f32 %v661, 2.0
        %v724 = vmul.f32 %v666, 2.0
        %v725 = vsub.f32 %v709, %v717
        %v726 = vsub.f32 %v710, %v718
        %v727 = vsub.f32 %v711, %v719
        %v728 = vsub.f32 %v712, %v720
        %v729 = vsub.f32 %v713, %v721
        %v730 = vsub.f32 %v714, %v722
        %v731 = vsub.f32 %v715, %v723
        %v732 = vsub.f32 %v716, %v724
        %v733 = vmax.f32 %v725, 0.0
        %v734 = vmax.f32 %v726, 0.0
        %v735 = vmax.f32 %v727, 0.0
        %v736 = vmax.f32 %v728, 0.0
        %v737 = vmax.f32 %v729, 0.0
        %v738 = vmax.f32 %v730, 0.0
        %v739 = vmax.f32 %v731, 0.0
        %v740 = vmax.f32 %v732, 0.0
        %v741 = vlaneseq
        %v742 = vand.u32 %v741, 127
        %v751 = vand.u32 %v733, 4294967232
        %v752 = vand.u32 %v734, 4294967232
        %v753 = vand.u32 %v735, 4294967232
        %v754 = vand.u32 %v736, 4294967232
        %v755 = vand.u32 %v737, 4294967232
        %v756 = vand.u32 %v738, 4294967232
        %v757 = vand.u32 %v739, 4294967232
        %v758 = vand.u32 %v740, 4294967232
        %v759 = vor.u32 %v751, %v742
        %v760 = vor.u32 %v752, %v742
        %v761 = vor.u32 %v753, %v742
        %v762 = vor.u32 %v754, %v742
        %v763 = vor.u32 %v755, %v742
        %v764 = vor.u32 %v756, %v742
        %v765 = vor.u32 %v757, %v742
        %v766 = vor.u32 %v758, %v742
        %v775 = vpack.c.bf16 %v327, %v327
        %v776 = vpack.c.bf16 %v328, %v328
        %778 = vset.pattern.permute.xlu0 0
        %779 = vperm.xlu0 %778, %v321
        %v780 = vpop.permute.xlu0 %779
        %783 = vset.pattern.permute.xlu0 0
        %784 = vperm.xlu0 %783, %v322
        %v785 = vpop.permute.xlu0 %784
        %v789 = vunpack.c.l.b16 %v317
        %v790 = vunpack.c.l.b16 %v318
        %v791 = vpack.c.b16 %v790, %v789
        %v793 = vsel %vm362, %v791, 0
        %vm795 = vcmask 1040384
        %vm796 = vcmask 1041408
        %v797 = vsel %vm795, 4294967295, 65535
        %v798 = vsel %vm796, %v797, 0
        %v800 = vand.u32 %v775, %v798
        %802 = vmatprep.subr.bf16.mxu0 0
        %803 = vmatpush1.bf16.msra.mxu0 0
        %804 = vmatprep.subr.bf16.mxu0 0
        %805 = vmatpush1.bf16.msra.mxu0 0
        %806 = vmatprep.subr.bf16.mxu0 0
        %807 = vmatpush1.bf16.msra.mxu0 0
        %808 = vmatprep.subr.bf16.mxu0 0
        %809 = vmatpush1.bf16.msra.mxu0 0
        %810 = vmatprep.subr.bf16.mxu0 0
        %811 = vmatpush1.bf16.msra.mxu0 0
        %812 = vmatprep.subr.bf16.mxu0 0
        %813 = vmatpush1.bf16.msra.mxu0 0
        %814 = vmatprep.subr.bf16.mxu0 0
        %815 = vmatpush1.bf16.msra.mxu0 0
        %816 = vmatprep.subr.bf16.mxu0 0
        %817 = vmatpush1.bf16.msra.mxu0 %v800
        %818 = vmatprep.subr.bf16.mxu0 0
        %819 = vmatpush2.bf16.msra.mxu0 0
        %820 = vmatprep.subr.bf16.mxu0 0
        %821 = vmatpush2.bf16.msra.mxu0 0
        %822 = vmatprep.subr.bf16.mxu0 0
        %823 = vmatpush2.bf16.msra.mxu0 0
        %824 = vmatprep.subr.bf16.mxu0 0
        %825 = vmatpush2.bf16.msra.mxu0 0
        %826 = vmatprep.subr.bf16.mxu0 0
        %827 = vmatpush2.bf16.msra.mxu0 0
        %828 = vmatprep.subr.bf16.mxu0 0
        %829 = vmatpush2.bf16.msra.mxu0 0
        %830 = vmatprep.subr.bf16.mxu0 0
        %831 = vmatpush2.bf16.msra.mxu0 0
        %832 = vmatprep.subr.bf16.mxu0 0
        %833 = vmatpush2.bf16.msra.mxu0 0
        %834 = vmatprep.mubr.bf16.mxu0 0
        %835 = vmatmul.mubr.bf16.gmra.mxu0 %v793
        %v836 = vpop.f32.mrf.mxu0
        %v837 = vadd.f32 %v780, %v836
        %v838 = vpop.f32.mrf.mxu0
        %v839 = vpop.f32.mrf.mxu0
        %v840 = vadd.f32 %v785, %v839
        %v841 = vpop.f32.mrf.mxu0
        %842 = vdwg.mxu0
        %vm843 = vcmask 523264
        %v844 = vsel %vm843, %v759, inf
        %845 = vmin.xlane.f32.xlu0 %v844
        %v846 = vpop.xlane.xlu0 %845
        %v847 = vsel %vm843, %v760, inf
        %848 = vmin.xlane.f32.xlu0 %v847
        %v849 = vpop.xlane.xlu0 %848
        %v850 = vsel %vm843, %v761, inf
        %851 = vmin.xlane.f32.xlu0 %v850
        %v852 = vpop.xlane.xlu0 %851
        %v853 = vsel %vm843, %v762, inf
        %854 = vmin.xlane.f32.xlu0 %v853
        %v855 = vpop.xlane.xlu0 %854
        %v856 = vsel %vm843, %v763, inf
        %857 = vmin.xlane.f32.xlu0 %v856
        %v858 = vpop.xlane.xlu0 %857
        %v859 = vsel %vm843, %v764, inf
        %860 = vmin.xlane.f32.xlu0 %v859
        %v861 = vpop.xlane.xlu0 %860
        %v862 = vsel %vm843, %v765, inf
        %863 = vmin.xlane.f32.xlu0 %v862
        %v864 = vpop.xlane.xlu0 %863
        %v865 = vsel %vm843, %v766, inf
        %866 = vmin.xlane.f32.xlu0 %v865
        %v867 = vpop.xlane.xlu0 %866
        %vm868 = vcmp.eq.f32.partialorder %v759, %v846
        %vm869 = vcmp.eq.f32.partialorder %v760, %v849
        %vm870 = vcmp.eq.f32.partialorder %v761, %v852
        %vm871 = vcmp.eq.f32.partialorder %v762, %v855
        %vm872 = vcmp.eq.f32.partialorder %v763, %v858
        %vm873 = vcmp.eq.f32.partialorder %v764, %v861
        %vm874 = vcmp.eq.f32.partialorder %v765, %v864
        %vm875 = vcmp.eq.f32.partialorder %v766, %v867
        %v876 = vsel %vm868, 1.0, 0.0
        %v877 = vsel %vm869, 1.0, 0.0
        %v878 = vsel %vm870, 1.0, 0.0
        %v879 = vsel %vm871, 1.0, 0.0
        %v880 = vsel %vm872, 1.0, 0.0
        %v881 = vsel %vm873, 1.0, 0.0
        %v882 = vsel %vm874, 1.0, 0.0
        %v883 = vsel %vm875, 1.0, 0.0
        %v884 = vpack.c.bf16 %v877, %v876
        %v885 = vpack.c.bf16 %v879, %v878
        %v886 = vpack.c.bf16 %v881, %v880
        %v887 = vpack.c.bf16 %v883, %v882
        %v889 = vsel %vm843, %v776, 0
        %v892 = vsel %vm843, %v884, 0
        %v895 = vsel %vm843, %v885, 0
        %v898 = vsel %vm843, %v886, 0
        %v901 = vsel %vm843, %v887, 0
        %903 = vmatprep.subr.bf16.mxu0 0
        %904 = vmatpush1.bf16.xpose.msra.mxu0 0
        %905 = vmatprep.subr.bf16.mxu0 0
        %906 = vmatpush1.bf16.xpose.msra.mxu0 0
        %907 = vmatprep.subr.bf16.mxu0 0
        %908 = vmatpush1.bf16.xpose.msra.mxu0 0
        %909 = vmatprep.subr.bf16.mxu0 0
        %910 = vmatpush1.bf16.xpose.msra.mxu0 0
        %911 = vmatprep.subr.bf16.mxu0 0
        %912 = vmatpush1.bf16.xpose.msra.mxu0 %v901
        %913 = vmatprep.subr.bf16.mxu0 0
        %914 = vmatpush1.bf16.xpose.msra.mxu0 %v898
        %915 = vmatprep.subr.bf16.mxu0 0
        %916 = vmatpush1.bf16.xpose.msra.mxu0 %v895
        %917 = vmatprep.subr.bf16.mxu0 0
        %918 = vmatpush1.bf16.xpose.msra.mxu0 %v892
        %919 = vmatprep.subr.bf16.mxu0 0
        %920 = vmatpush2.bf16.xpose.msra.mxu0 0
        %921 = vmatprep.subr.bf16.mxu0 0
        %922 = vmatpush2.bf16.xpose.msra.mxu0 0
        %923 = vmatprep.subr.bf16.mxu0 0
        %924 = vmatpush2.bf16.xpose.msra.mxu0 0
        %925 = vmatprep.subr.bf16.mxu0 0
        %926 = vmatpush2.bf16.xpose.msra.mxu0 0
        %927 = vmatprep.subr.bf16.mxu0 0
        %928 = vmatpush2.bf16.xpose.msra.mxu0 0
        %929 = vmatprep.subr.bf16.mxu0 0
        %930 = vmatpush2.bf16.xpose.msra.mxu0 0
        %931 = vmatprep.subr.bf16.mxu0 0
        %932 = vmatpush2.bf16.xpose.msra.mxu0 0
        %933 = vmatprep.subr.bf16.mxu0 0
        %934 = vmatpush2.bf16.xpose.msra.mxu0 0
        %935 = vmatprep.mubr.bf16.mxu0 0
        %936 = vmatmul.mubr.bf16.gmra.mxu0 %v889
        %v937 = vpop.f32.mrf.mxu0
        %v938 = vadd.f32 0.0, %v937
        %v939 = vpop.f32.mrf.mxu0
        %v940 = vpop.f32.mrf.mxu0
        %v941 = vpop.f32.mrf.mxu0
        %942 = vdwg.mxu0
        %v943 = vpack.c.bf16 %v938, %v938
        %v946 = vunpack.c.l.b16 %v319
        %v947 = vunpack.c.l.b16 %v320
        %v948 = vpack.c.b16 %v947, %v946
        %v950 = vsel %vm362, %v948, 0
        %v953 = vand.u32 %v943, %v798
        %955 = vmatprep.subr.bf16.mxu0 0
        %956 = vmatpush1.bf16.msra.mxu0 0
        %957 = vmatprep.subr.bf16.mxu0 0
        %958 = vmatpush1.bf16.msra.mxu0 0
        %959 = vmatprep.subr.bf16.mxu0 0
        %960 = vmatpush1.bf16.msra.mxu0 0
        %961 = vmatprep.subr.bf16.mxu0 0
        %962 = vmatpush1.bf16.msra.mxu0 0
        %963 = vmatprep.subr.bf16.mxu0 0
        %964 = vmatpush1.bf16.msra.mxu0 0
        %965 = vmatprep.subr.bf16.mxu0 0
        %966 = vmatpush1.bf16.msra.mxu0 0
        %967 = vmatprep.subr.bf16.mxu0 0
        %968 = vmatpush1.bf16.msra.mxu0 0
        %969 = vmatprep.subr.bf16.mxu0 0
        %970 = vmatpush1.bf16.msra.mxu0 %v953
        %971 = vmatprep.subr.bf16.mxu0 0
        %972 = vmatpush2.bf16.msra.mxu0 0
        %973 = vmatprep.subr.bf16.mxu0 0
        %974 = vmatpush2.bf16.msra.mxu0 0
        %975 = vmatprep.subr.bf16.mxu0 0
        %976 = vmatpush2.bf16.msra.mxu0 0
        %977 = vmatprep.subr.bf16.mxu0 0
        %978 = vmatpush2.bf16.msra.mxu0 0
        %979 = vmatprep.subr.bf16.mxu0 0
        %980 = vmatpush2.bf16.msra.mxu0 0
        %981 = vmatprep.subr.bf16.mxu0 0
        %982 = vmatpush2.bf16.msra.mxu0 0
        %983 = vmatprep.subr.bf16.mxu0 0
        %984 = vmatpush2.bf16.msra.mxu0 0
        %985 = vmatprep.subr.bf16.mxu0 0
        %986 = vmatpush2.bf16.msra.mxu0 0
        %987 = vmatprep.mubr.bf16.mxu0 0
        %988 = vmatmul.mubr.bf16.gmra.mxu0 %v950
        %v989 = vpop.f32.mrf.mxu0
        %v990 = vadd.f32 0.0, %v989
        %v991 = vpop.f32.mrf.mxu0
        %v992 = vpop.f32.mrf.mxu0
        %v993 = vadd.f32 0.0, %v992
        %v994 = vpop.f32.mrf.mxu0
        %995 = vdwg.mxu0
        %v996 = vadd.f32 %v837, %v990
        %v997 = vadd.f32 %v840, %v993
        %v998 = vmax.f32 %v996, 0.0
        %v999 = vmax.f32 %v997, 0.0
        %v1000 = vpack.c.bf16 %v999, %v998
        %1002 = vset.pattern.permute.xlu0 0
        %1003 = vperm.xlu0 %1002, %v325
        %v1004 = vpop.permute.xlu0 %1003
        %1007 = vset.pattern.permute.xlu0 0
        %1008 = vperm.xlu0 %1007, %v326
        %v1009 = vpop.permute.xlu0 %1008
        %v1013 = vunpack.c.l.b16 %v323
        %v1014 = vunpack.c.l.b16 %v324
        %v1015 = vpack.c.b16 %v1014, %v1013
        %vm1016 = vcmask 130048
        %v1018 = vsel %vm1016, %v1015, 0
        %1020 = vmatprep.subr.bf16.mxu0 0
        %1021 = vmatpush1.bf16.msra.mxu0 0
        %1022 = vmatprep.subr.bf16.mxu0 0
        %1023 = vmatpush1.bf16.msra.mxu0 0
        %1024 = vmatprep.subr.bf16.mxu0 0
        %1025 = vmatpush1.bf16.msra.mxu0 0
        %1026 = vmatprep.subr.bf16.mxu0 0
        %1027 = vmatpush1.bf16.msra.mxu0 0
        %1028 = vmatprep.subr.bf16.mxu0 0
        %1029 = vmatpush1.bf16.msra.mxu0 0
        %1030 = vmatprep.subr.bf16.mxu0 0
        %1031 = vmatpush1.bf16.msra.mxu0 0
        %1032 = vmatprep.subr.bf16.mxu0 0
        %1033 = vmatpush1.bf16.msra.mxu0 0
        %1034 = vmatprep.subr.bf16.mxu0 0
        %1035 = vmatpush1.bf16.msra.mxu0 %v1000
        %1036 = vmatprep.subr.bf16.mxu0 0
        %1037 = vmatpush2.bf16.msra.mxu0 0
        %1038 = vmatprep.subr.bf16.mxu0 0
        %1039 = vmatpush2.bf16.msra.mxu0 0
        %1040 = vmatprep.subr.bf16.mxu0 0
        %1041 = vmatpush2.bf16.msra.mxu0 0
        %1042 = vmatprep.subr.bf16.mxu0 0
        %1043 = vmatpush2.bf16.msra.mxu0 0
        %1044 = vmatprep.subr.bf16.mxu0 0
        %1045 = vmatpush2.bf16.msra.mxu0 0
        %1046 = vmatprep.subr.bf16.mxu0 0
        %1047 = vmatpush2.bf16.msra.mxu0 0
        %1048 = vmatprep.subr.bf16.mxu0 0
        %1049 = vmatpush2.bf16.msra.mxu0 0
        %1050 = vmatprep.subr.bf16.mxu0 0
        %1051 = vmatpush2.bf16.msra.mxu0 0
        %1052 = vmatprep.mubr.bf16.mxu0 0
        %1053 = vmatmul.mubr.bf16.gmra.mxu0 %v1018
        %v1054 = vpop.f32.mrf.mxu0
        %v1055 = vadd.f32 %v1004, %v1054
        %v1056 = vpop.f32.mrf.mxu0
        %v1057 = vpop.f32.mrf.mxu0
        %v1058 = vadd.f32 %v1009, %v1057
        %v1059 = vpop.f32.mrf.mxu0
        %1060 = vdwg.mxu0
        %v1061 = vmax.f32 %v1055, 0.0
        %v1062 = vmax.f32 %v1058, 0.0
        %v1063 = vsel %vm868, 3.4028235e+38, %v759
        %v1064 = vsel %vm869, 3.4028235e+38, %v760
        %v1065 = vsel %vm870, 3.4028235e+38, %v761
        %v1066 = vsel %vm871, 3.4028235e+38, %v762
        %v1067 = vsel %vm872, 3.4028235e+38, %v763
        %v1068 = vsel %vm873, 3.4028235e+38, %v764
        %v1069 = vsel %vm874, 3.4028235e+38, %v765
        %v1070 = vsel %vm875, 3.4028235e+38, %v766
        %v1071 = vsel %vm843, %v1063, inf
        %1072 = vmin.xlane.f32.xlu0 %v1071
        %v1073 = vpop.xlane.xlu0 %1072
        %v1074 = vsel %vm843, %v1064, inf
        %1075 = vmin.xlane.f32.xlu0 %v1074
        %v1076 = vpop.xlane.xlu0 %1075
        %v1077 = vsel %vm843, %v1065, inf
        %1078 = vmin.xlane.f32.xlu0 %v1077
        %v1079 = vpop.xlane.xlu0 %1078
        %v1080 = vsel %vm843, %v1066, inf
        %1081 = vmin.xlane.f32.xlu0 %v1080
        %v1082 = vpop.xlane.xlu0 %1081
        %v1083 = vsel %vm843, %v1067, inf
        %1084 = vmin.xlane.f32.xlu0 %v1083
        %v1085 = vpop.xlane.xlu0 %1084
        %v1086 = vsel %vm843, %v1068, inf
        %1087 = vmin.xlane.f32.xlu0 %v1086
        %v1088 = vpop.xlane.xlu0 %1087
        %v1089 = vsel %vm843, %v1069, inf
        %1090 = vmin.xlane.f32.xlu0 %v1089
        %v1091 = vpop.xlane.xlu0 %1090
        %v1092 = vsel %vm843, %v1070, inf
        %1093 = vmin.xlane.f32.xlu0 %v1092
        %v1094 = vpop.xlane.xlu0 %1093
        %vm1095 = vcmp.eq.f32.partialorder %v1063, %v1073
        %vm1096 = vcmp.eq.f32.partialorder %v1064, %v1076
        %vm1097 = vcmp.eq.f32.partialorder %v1065, %v1079
        %vm1098 = vcmp.eq.f32.partialorder %v1066, %v1082
        %vm1099 = vcmp.eq.f32.partialorder %v1067, %v1085
        %vm1100 = vcmp.eq.f32.partialorder %v1068, %v1088
        %vm1101 = vcmp.eq.f32.partialorder %v1069, %v1091
        %vm1102 = vcmp.eq.f32.partialorder %v1070, %v1094
        %v1103 = vsel %vm1095, 1.0, 0.0
        %v1104 = vsel %vm1096, 1.0, 0.0
        %v1105 = vsel %vm1097, 1.0, 0.0
        %v1106 = vsel %vm1098, 1.0, 0.0
        %v1107 = vsel %vm1099, 1.0, 0.0
        %v1108 = vsel %vm1100, 1.0, 0.0
        %v1109 = vsel %vm1101, 1.0, 0.0
        %v1110 = vsel %vm1102, 1.0, 0.0
        %v1111 = vpack.c.bf16 %v1104, %v1103
        %v1112 = vpack.c.bf16 %v1106, %v1105
        %v1113 = vpack.c.bf16 %v1108, %v1107
        %v1114 = vpack.c.bf16 %v1110, %v1109
        %v1116 = vsel %vm843, %v1111, 0
        %v1119 = vsel %vm843, %v1112, 0
        %v1122 = vsel %vm843, %v1113, 0
        %v1125 = vsel %vm843, %v1114, 0
        %1127 = vmatprep.subr.bf16.mxu0 0
        %1128 = vmatpush1.bf16.xpose.msra.mxu0 0
        %1129 = vmatprep.subr.bf16.mxu0 0
        %1130 = vmatpush1.bf16.xpose.msra.mxu0 0
        %1131 = vmatprep.subr.bf16.mxu0 0
        %1132 = vmatpush1.bf16.xpose.msra.mxu0 0
        %1133 = vmatprep.subr.bf16.mxu0 0
        %1134 = vmatpush1.bf16.xpose.msra.mxu0 0
        %1135 = vmatprep.subr.bf16.mxu0 0
        %1136 = vmatpush1.bf16.xpose.msra.mxu0 %v1125
        %1137 = vmatprep.subr.bf16.mxu0 0
        %1138 = vmatpush1.bf16.xpose.msra.mxu0 %v1122
        %1139 = vmatprep.subr.bf16.mxu0 0
        %1140 = vmatpush1.bf16.xpose.msra.mxu0 %v1119
        %1141 = vmatprep.subr.bf16.mxu0 0
        %1142 = vmatpush1.bf16.xpose.msra.mxu0 %v1116
        %1143 = vmatprep.subr.bf16.mxu0 0
        %1144 = vmatpush2.bf16.xpose.msra.mxu0 0
        %1145 = vmatprep.subr.bf16.mxu0 0
        %1146 = vmatpush2.bf16.xpose.msra.mxu0 0
        %1147 = vmatprep.subr.bf16.mxu0 0
        %1148 = vmatpush2.bf16.xpose.msra.mxu0 0
        %1149 = vmatprep.subr.bf16.mxu0 0
        %1150 = vmatpush2.bf16.xpose.msra.mxu0 0
        %1151 = vmatprep.subr.bf16.mxu0 0
        %1152 = vmatpush2.bf16.xpose.msra.mxu0 0
        %1153 = vmatprep.subr.bf16.mxu0 0
        %1154 = vmatpush2.bf16.xpose.msra.mxu0 0
        %1155 = vmatprep.subr.bf16.mxu0 0
        %1156 = vmatpush2.bf16.xpose.msra.mxu0 0
        %1157 = vmatprep.subr.bf16.mxu0 0
        %1158 = vmatpush2.bf16.xpose.msra.mxu0 0
        %1159 = vmatprep.mubr.bf16.mxu0 0
        %1160 = vmatmul.mubr.bf16.gmra.mxu0 %v889
        %v1161 = vpop.f32.mrf.mxu0
        %v1162 = vadd.f32 0.0, %v1161
        %v1163 = vpop.f32.mrf.mxu0
        %v1164 = vpop.f32.mrf.mxu0
        %v1165 = vpop.f32.mrf.mxu0
        %1166 = vdwg.mxu0
        %v1167 = vpack.c.bf16 %v1162, %v1162
        %v1169 = vand.u32 %v1167, %v798
        %1171 = vmatprep.subr.bf16.mxu0 0
        %1172 = vmatpush1.bf16.msra.mxu0 0
        %1173 = vmatprep.subr.bf16.mxu0 0
        %1174 = vmatpush1.bf16.msra.mxu0 0
        %1175 = vmatprep.subr.bf16.mxu0 0
        %1176 = vmatpush1.bf16.msra.mxu0 0
        %1177 = vmatprep.subr.bf16.mxu0 0
        %1178 = vmatpush1.bf16.msra.mxu0 0
        %1179 = vmatprep.subr.bf16.mxu0 0
        %1180 = vmatpush1.bf16.msra.mxu0 0
        %1181 = vmatprep.subr.bf16.mxu0 0
        %1182 = vmatpush1.bf16.msra.mxu0 0
        %1183 = vmatprep.subr.bf16.mxu0 0
        %1184 = vmatpush1.bf16.msra.mxu0 0
        %1185 = vmatprep.subr.bf16.mxu0 0
        %1186 = vmatpush1.bf16.msra.mxu0 %v1169
        %1187 = vmatprep.subr.bf16.mxu0 0
        %1188 = vmatpush2.bf16.msra.mxu0 0
        %1189 = vmatprep.subr.bf16.mxu0 0
        %1190 = vmatpush2.bf16.msra.mxu0 0
        %1191 = vmatprep.subr.bf16.mxu0 0
        %1192 = vmatpush2.bf16.msra.mxu0 0
        %1193 = vmatprep.subr.bf16.mxu0 0
        %1194 = vmatpush2.bf16.msra.mxu0 0
        %1195 = vmatprep.subr.bf16.mxu0 0
        %1196 = vmatpush2.bf16.msra.mxu0 0
        %1197 = vmatprep.subr.bf16.mxu0 0
        %1198 = vmatpush2.bf16.msra.mxu0 0
        %1199 = vmatprep.subr.bf16.mxu0 0
        %1200 = vmatpush2.bf16.msra.mxu0 0
        %1201 = vmatprep.subr.bf16.mxu0 0
        %1202 = vmatpush2.bf16.msra.mxu0 0
        %1203 = vmatprep.mubr.bf16.mxu0 0
        %1204 = vmatmul.mubr.bf16.gmra.mxu0 %v950
        %v1205 = vpop.f32.mrf.mxu0
        %v1206 = vadd.f32 0.0, %v1205
        %v1207 = vpop.f32.mrf.mxu0
        %v1208 = vpop.f32.mrf.mxu0
        %v1209 = vadd.f32 0.0, %v1208
        %v1210 = vpop.f32.mrf.mxu0
        %1211 = vdwg.mxu0
        %v1212 = vadd.f32 %v837, %v1206
        %v1213 = vadd.f32 %v840, %v1209
        %v1214 = vmax.f32 %v1212, 0.0
        %v1215 = vmax.f32 %v1213, 0.0
        %v1216 = vpack.c.bf16 %v1215, %v1214
        %1217 = vmatprep.subr.bf16.mxu0 0
        %1218 = vmatpush1.bf16.msra.mxu0 0
        %1219 = vmatprep.subr.bf16.mxu0 0
        %1220 = vmatpush1.bf16.msra.mxu0 0
        %1221 = vmatprep.subr.bf16.mxu0 0
        %1222 = vmatpush1.bf16.msra.mxu0 0
        %1223 = vmatprep.subr.bf16.mxu0 0
        %1224 = vmatpush1.bf16.msra.mxu0 0
        %1225 = vmatprep.subr.bf16.mxu0 0
        %1226 = vmatpush1.bf16.msra.mxu0 0
        %1227 = vmatprep.subr.bf16.mxu0 0
        %1228 = vmatpush1.bf16.msra.mxu0 0
        %1229 = vmatprep.subr.bf16.mxu0 0
        %1230 = vmatpush1.bf16.msra.mxu0 0
        %1231 = vmatprep.subr.bf16.mxu0 0
        %1232 = vmatpush1.bf16.msra.mxu0 %v1216
        %1233 = vmatprep.subr.bf16.mxu0 0
        %1234 = vmatpush2.bf16.msra.mxu0 0
        %1235 = vmatprep.subr.bf16.mxu0 0
        %1236 = vmatpush2.bf16.msra.mxu0 0
        %1237 = vmatprep.subr.bf16.mxu0 0
        %1238 = vmatpush2.bf16.msra.mxu0 0
        %1239 = vmatprep.subr.bf16.mxu0 0
        %1240 = vmatpush2.bf16.msra.mxu0 0
        %1241 = vmatprep.subr.bf16.mxu0 0
        %1242 = vmatpush2.bf16.msra.mxu0 0
        %1243 = vmatprep.subr.bf16.mxu0 0
        %1244 = vmatpush2.bf16.msra.mxu0 0
        %1245 = vmatprep.subr.bf16.mxu0 0
        %1246 = vmatpush2.bf16.msra.mxu0 0
        %1247 = vmatprep.subr.bf16.mxu0 0
        %1248 = vmatpush2.bf16.msra.mxu0 0
        %1249 = vmatprep.mubr.bf16.mxu0 0
        %1250 = vmatmul.mubr.bf16.gmra.mxu0 %v1018
        %v1251 = vpop.f32.mrf.mxu0
        %v1252 = vadd.f32 %v1004, %v1251
        %v1253 = vpop.f32.mrf.mxu0
        %v1254 = vpop.f32.mrf.mxu0
        %v1255 = vadd.f32 %v1009, %v1254
        %v1256 = vpop.f32.mrf.mxu0
        %1257 = vdwg.mxu0
        %v1258 = vmax.f32 %v1252, 0.0
        %v1259 = vmax.f32 %v1255, 0.0
        %v1260 = vmax.f32 %v1061, %v1258
        %v1261 = vmax.f32 %v1062, %v1259
        %v1262 = vsel %vm1095, 3.4028235e+38, %v1063
        %v1263 = vsel %vm1096, 3.4028235e+38, %v1064
        %v1264 = vsel %vm1097, 3.4028235e+38, %v1065
        %v1265 = vsel %vm1098, 3.4028235e+38, %v1066
        %v1266 = vsel %vm1099, 3.4028235e+38, %v1067
        %v1267 = vsel %vm1100, 3.4028235e+38, %v1068
        %v1268 = vsel %vm1101, 3.4028235e+38, %v1069
        %v1269 = vsel %vm1102, 3.4028235e+38, %v1070
        %v1270 = vsel %vm843, %v1262, inf
        %1271 = vmin.xlane.f32.xlu0 %v1270
        %v1272 = vpop.xlane.xlu0 %1271
        %v1273 = vsel %vm843, %v1263, inf
        %1274 = vmin.xlane.f32.xlu0 %v1273
        %v1275 = vpop.xlane.xlu0 %1274
        %v1276 = vsel %vm843, %v1264, inf
        %1277 = vmin.xlane.f32.xlu0 %v1276
        %v1278 = vpop.xlane.xlu0 %1277
        %v1279 = vsel %vm843, %v1265, inf
        %1280 = vmin.xlane.f32.xlu0 %v1279
        %v1281 = vpop.xlane.xlu0 %1280
        %v1282 = vsel %vm843, %v1266, inf
        %1283 = vmin.xlane.f32.xlu0 %v1282
        %v1284 = vpop.xlane.xlu0 %1283
        %v1285 = vsel %vm843, %v1267, inf
        %1286 = vmin.xlane.f32.xlu0 %v1285
        %v1287 = vpop.xlane.xlu0 %1286
        %v1288 = vsel %vm843, %v1268, inf
        %1289 = vmin.xlane.f32.xlu0 %v1288
        %v1290 = vpop.xlane.xlu0 %1289
        %v1291 = vsel %vm843, %v1269, inf
        %1292 = vmin.xlane.f32.xlu0 %v1291
        %v1293 = vpop.xlane.xlu0 %1292
        %vm1294 = vcmp.eq.f32.partialorder %v1262, %v1272
        %vm1295 = vcmp.eq.f32.partialorder %v1263, %v1275
        %vm1296 = vcmp.eq.f32.partialorder %v1264, %v1278
        %vm1297 = vcmp.eq.f32.partialorder %v1265, %v1281
        %vm1298 = vcmp.eq.f32.partialorder %v1266, %v1284
        %vm1299 = vcmp.eq.f32.partialorder %v1267, %v1287
        %vm1300 = vcmp.eq.f32.partialorder %v1268, %v1290
        %vm1301 = vcmp.eq.f32.partialorder %v1269, %v1293
        %v1302 = vsel %vm1294, 1.0, 0.0
        %v1303 = vsel %vm1295, 1.0, 0.0
        %v1304 = vsel %vm1296, 1.0, 0.0
        %v1305 = vsel %vm1297, 1.0, 0.0
        %v1306 = vsel %vm1298, 1.0, 0.0
        %v1307 = vsel %vm1299, 1.0, 0.0
        %v1308 = vsel %vm1300, 1.0, 0.0
        %v1309 = vsel %vm1301, 1.0, 0.0
        %v1310 = vpack.c.bf16 %v1303, %v1302
        %v1311 = vpack.c.bf16 %v1305, %v1304
        %v1312 = vpack.c.bf16 %v1307, %v1306
        %v1313 = vpack.c.bf16 %v1309, %v1308
        %v1315 = vsel %vm843, %v1310, 0
        %v1318 = vsel %vm843, %v1311, 0
        %v1321 = vsel %vm843, %v1312, 0
        %v1324 = vsel %vm843, %v1313, 0
        %1326 = vmatprep.subr.bf16.mxu0 0
        %1327 = vmatpush1.bf16.xpose.msra.mxu0 0
        %1328 = vmatprep.subr.bf16.mxu0 0
        %1329 = vmatpush1.bf16.xpose.msra.mxu0 0
        %1330 = vmatprep.subr.bf16.mxu0 0
        %1331 = vmatpush1.bf16.xpose.msra.mxu0 0
        %1332 = vmatprep.subr.bf16.mxu0 0
        %1333 = vmatpush1.bf16.xpose.msra.mxu0 0
        %1334 = vmatprep.subr.bf16.mxu0 0
        %1335 = vmatpush1.bf16.xpose.msra.mxu0 %v1324
        %1336 = vmatprep.subr.bf16.mxu0 0
        %1337 = vmatpush1.bf16.xpose.msra.mxu0 %v1321
        %1338 = vmatprep.subr.bf16.mxu0 0
        %1339 = vmatpush1.bf16.xpose.msra.mxu0 %v1318
        %1340 = vmatprep.subr.bf16.mxu0 0
        %1341 = vmatpush1.bf16.xpose.msra.mxu0 %v1315
        %1342 = vmatprep.subr.bf16.mxu0 0
        %1343 = vmatpush2.bf16.xpose.msra.mxu0 0
        %1344 = vmatprep.subr.bf16.mxu0 0
        %1345 = vmatpush2.bf16.xpose.msra.mxu0 0
        %1346 = vmatprep.subr.bf16.mxu0 0
        %1347 = vmatpush2.bf16.xpose.msra.mxu0 0
        %1348 = vmatprep.subr.bf16.mxu0 0
        %1349 = vmatpush2.bf16.xpose.msra.mxu0 0
        %1350 = vmatprep.subr.bf16.mxu0 0
        %1351 = vmatpush2.bf16.xpose.msra.mxu0 0
        %1352 = vmatprep.subr.bf16.mxu0 0
        %1353 = vmatpush2.bf16.xpose.msra.mxu0 0
        %1354 = vmatprep.subr.bf16.mxu0 0
        %1355 = vmatpush2.bf16.xpose.msra.mxu0 0
        %1356 = vmatprep.subr.bf16.mxu0 0
        %1357 = vmatpush2.bf16.xpose.msra.mxu0 0
        %1358 = vmatprep.mubr.bf16.mxu0 0
        %1359 = vmatmul.mubr.bf16.gmra.mxu0 %v889
        %v1360 = vpop.f32.mrf.mxu0
        %v1361 = vadd.f32 0.0, %v1360
        %v1362 = vpop.f32.mrf.mxu0
        %v1363 = vpop.f32.mrf.mxu0
        %v1364 = vpop.f32.mrf.mxu0
        %1365 = vdwg.mxu0
        %v1366 = vpack.c.bf16 %v1361, %v1361
        %v1368 = vand.u32 %v1366, %v798
        %1370 = vmatprep.subr.bf16.mxu0 0
        %1371 = vmatpush1.bf16.msra.mxu0 0
        %1372 = vmatprep.subr.bf16.mxu0 0
        %1373 = vmatpush1.bf16.msra.mxu0 0
        %1374 = vmatprep.subr.bf16.mxu0 0
        %1375 = vmatpush1.bf16.msra.mxu0 0
        %1376 = vmatprep.subr.bf16.mxu0 0
        %1377 = vmatpush1.bf16.msra.mxu0 0
        %1378 = vmatprep.subr.bf16.mxu0 0
        %1379 = vmatpush1.bf16.msra.mxu0 0
        %1380 = vmatprep.subr.bf16.mxu0 0
        %1381 = vmatpush1.bf16.msra.mxu0 0
        %1382 = vmatprep.subr.bf16.mxu0 0
        %1383 = vmatpush1.bf16.msra.mxu0 0
        %1384 = vmatprep.subr.bf16.mxu0 0
        %1385 = vmatpush1.bf16.msra.mxu0 %v1368
        %1386 = vmatprep.subr.bf16.mxu0 0
        %1387 = vmatpush2.bf16.msra.mxu0 0
        %1388 = vmatprep.subr.bf16.mxu0 0
        %1389 = vmatpush2.bf16.msra.mxu0 0
        %1390 = vmatprep.subr.bf16.mxu0 0
        %1391 = vmatpush2.bf16.msra.mxu0 0
        %1392 = vmatprep.subr.bf16.mxu0 0
        %1393 = vmatpush2.bf16.msra.mxu0 0
        %1394 = vmatprep.subr.bf16.mxu0 0
        %1395 = vmatpush2.bf16.msra.mxu0 0
        %1396 = vmatprep.subr.bf16.mxu0 0
        %1397 = vmatpush2.bf16.msra.mxu0 0
        %1398 = vmatprep.subr.bf16.mxu0 0
        %1399 = vmatpush2.bf16.msra.mxu0 0
        %1400 = vmatprep.subr.bf16.mxu0 0
        %1401 = vmatpush2.bf16.msra.mxu0 0
        %1402 = vmatprep.mubr.bf16.mxu0 0
        %1403 = vmatmul.mubr.bf16.gmra.mxu0 %v950
        %v1404 = vpop.f32.mrf.mxu0
        %v1405 = vadd.f32 0.0, %v1404
        %v1406 = vpop.f32.mrf.mxu0
        %v1407 = vpop.f32.mrf.mxu0
        %v1408 = vadd.f32 0.0, %v1407
        %v1409 = vpop.f32.mrf.mxu0
        %1410 = vdwg.mxu0
        %v1411 = vadd.f32 %v837, %v1405
        %v1412 = vadd.f32 %v840, %v1408
        %v1413 = vmax.f32 %v1411, 0.0
        %v1414 = vmax.f32 %v1412, 0.0
        %v1415 = vpack.c.bf16 %v1414, %v1413
        %1416 = vmatprep.subr.bf16.mxu0 0
        %1417 = vmatpush1.bf16.msra.mxu0 0
        %1418 = vmatprep.subr.bf16.mxu0 0
        %1419 = vmatpush1.bf16.msra.mxu0 0
        %1420 = vmatprep.subr.bf16.mxu0 0
        %1421 = vmatpush1.bf16.msra.mxu0 0
        %1422 = vmatprep.subr.bf16.mxu0 0
        %1423 = vmatpush1.bf16.msra.mxu0 0
        %1424 = vmatprep.subr.bf16.mxu0 0
        %1425 = vmatpush1.bf16.msra.mxu0 0
        %1426 = vmatprep.subr.bf16.mxu0 0
        %1427 = vmatpush1.bf16.msra.mxu0 0
        %1428 = vmatprep.subr.bf16.mxu0 0
        %1429 = vmatpush1.bf16.msra.mxu0 0
        %1430 = vmatprep.subr.bf16.mxu0 0
        %1431 = vmatpush1.bf16.msra.mxu0 %v1415
        %1432 = vmatprep.subr.bf16.mxu0 0
        %1433 = vmatpush2.bf16.msra.mxu0 0
        %1434 = vmatprep.subr.bf16.mxu0 0
        %1435 = vmatpush2.bf16.msra.mxu0 0
        %1436 = vmatprep.subr.bf16.mxu0 0
        %1437 = vmatpush2.bf16.msra.mxu0 0
        %1438 = vmatprep.subr.bf16.mxu0 0
        %1439 = vmatpush2.bf16.msra.mxu0 0
        %1440 = vmatprep.subr.bf16.mxu0 0
        %1441 = vmatpush2.bf16.msra.mxu0 0
        %1442 = vmatprep.subr.bf16.mxu0 0
        %1443 = vmatpush2.bf16.msra.mxu0 0
        %1444 = vmatprep.subr.bf16.mxu0 0
        %1445 = vmatpush2.bf16.msra.mxu0 0
        %1446 = vmatprep.subr.bf16.mxu0 0
        %1447 = vmatpush2.bf16.msra.mxu0 0
        %1448 = vmatprep.mubr.bf16.mxu0 0
        %1449 = vmatmul.mubr.bf16.gmra.mxu0 %v1018
        %v1450 = vpop.f32.mrf.mxu0
        %v1451 = vadd.f32 %v1004, %v1450
        %v1452 = vpop.f32.mrf.mxu0
        %v1453 = vpop.f32.mrf.mxu0
        %v1454 = vadd.f32 %v1009, %v1453
        %v1455 = vpop.f32.mrf.mxu0
        %1456 = vdwg.mxu0
        %v1457 = vmax.f32 %v1451, 0.0
        %v1458 = vmax.f32 %v1454, 0.0
        %v1459 = vmax.f32 %v1260, %v1457
        %v1460 = vmax.f32 %v1261, %v1458
        %v1461 = vsel %vm1294, 3.4028235e+38, %v1262
        %v1462 = vsel %vm1295, 3.4028235e+38, %v1263
        %v1463 = vsel %vm1296, 3.4028235e+38, %v1264
        %v1464 = vsel %vm1297, 3.4028235e+38, %v1265
        %v1465 = vsel %vm1298, 3.4028235e+38, %v1266
        %v1466 = vsel %vm1299, 3.4028235e+38, %v1267
        %v1467 = vsel %vm1300, 3.4028235e+38, %v1268
        %v1468 = vsel %vm1301, 3.4028235e+38, %v1269
        %v1469 = vsel %vm843, %v1461, inf
        %1470 = vmin.xlane.f32.xlu0 %v1469
        %v1471 = vpop.xlane.xlu0 %1470
        %v1472 = vsel %vm843, %v1462, inf
        %1473 = vmin.xlane.f32.xlu0 %v1472
        %v1474 = vpop.xlane.xlu0 %1473
        %v1475 = vsel %vm843, %v1463, inf
        %1476 = vmin.xlane.f32.xlu0 %v1475
        %v1477 = vpop.xlane.xlu0 %1476
        %v1478 = vsel %vm843, %v1464, inf
        %1479 = vmin.xlane.f32.xlu0 %v1478
        %v1480 = vpop.xlane.xlu0 %1479
        %v1481 = vsel %vm843, %v1465, inf
        %1482 = vmin.xlane.f32.xlu0 %v1481
        %v1483 = vpop.xlane.xlu0 %1482
        %v1484 = vsel %vm843, %v1466, inf
        %1485 = vmin.xlane.f32.xlu0 %v1484
        %v1486 = vpop.xlane.xlu0 %1485
        %v1487 = vsel %vm843, %v1467, inf
        %1488 = vmin.xlane.f32.xlu0 %v1487
        %v1489 = vpop.xlane.xlu0 %1488
        %v1490 = vsel %vm843, %v1468, inf
        %1491 = vmin.xlane.f32.xlu0 %v1490
        %v1492 = vpop.xlane.xlu0 %1491
        %vm1493 = vcmp.eq.f32.partialorder %v1461, %v1471
        %vm1494 = vcmp.eq.f32.partialorder %v1462, %v1474
        %vm1495 = vcmp.eq.f32.partialorder %v1463, %v1477
        %vm1496 = vcmp.eq.f32.partialorder %v1464, %v1480
        %vm1497 = vcmp.eq.f32.partialorder %v1465, %v1483
        %vm1498 = vcmp.eq.f32.partialorder %v1466, %v1486
        %vm1499 = vcmp.eq.f32.partialorder %v1467, %v1489
        %vm1500 = vcmp.eq.f32.partialorder %v1468, %v1492
        %v1501 = vsel %vm1493, 1.0, 0.0
        %v1502 = vsel %vm1494, 1.0, 0.0
        %v1503 = vsel %vm1495, 1.0, 0.0
        %v1504 = vsel %vm1496, 1.0, 0.0
        %v1505 = vsel %vm1497, 1.0, 0.0
        %v1506 = vsel %vm1498, 1.0, 0.0
        %v1507 = vsel %vm1499, 1.0, 0.0
        %v1508 = vsel %vm1500, 1.0, 0.0
        %v1509 = vpack.c.bf16 %v1502, %v1501
        %v1510 = vpack.c.bf16 %v1504, %v1503
        %v1511 = vpack.c.bf16 %v1506, %v1505
        %v1512 = vpack.c.bf16 %v1508, %v1507
        %v1514 = vsel %vm843, %v1509, 0
        %v1517 = vsel %vm843, %v1510, 0
        %v1520 = vsel %vm843, %v1511, 0
        %v1523 = vsel %vm843, %v1512, 0
        %1525 = vmatprep.subr.bf16.mxu0 0
        %1526 = vmatpush1.bf16.xpose.msra.mxu0 0
        %1527 = vmatprep.subr.bf16.mxu0 0
        %1528 = vmatpush1.bf16.xpose.msra.mxu0 0
        %1529 = vmatprep.subr.bf16.mxu0 0
        %1530 = vmatpush1.bf16.xpose.msra.mxu0 0
        %1531 = vmatprep.subr.bf16.mxu0 0
        %1532 = vmatpush1.bf16.xpose.msra.mxu0 0
        %1533 = vmatprep.subr.bf16.mxu0 0
        %1534 = vmatpush1.bf16.xpose.msra.mxu0 %v1523
        %1535 = vmatprep.subr.bf16.mxu0 0
        %1536 = vmatpush1.bf16.xpose.msra.mxu0 %v1520
        %1537 = vmatprep.subr.bf16.mxu0 0
        %1538 = vmatpush1.bf16.xpose.msra.mxu0 %v1517
        %1539 = vmatprep.subr.bf16.mxu0 0
        %1540 = vmatpush1.bf16.xpose.msra.mxu0 %v1514
        %1541 = vmatprep.subr.bf16.mxu0 0
        %1542 = vmatpush2.bf16.xpose.msra.mxu0 0
        %1543 = vmatprep.subr.bf16.mxu0 0
        %1544 = vmatpush2.bf16.xpose.msra.mxu0 0
        %1545 = vmatprep.subr.bf16.mxu0 0
        %1546 = vmatpush2.bf16.xpose.msra.mxu0 0
        %1547 = vmatprep.subr.bf16.mxu0 0
        %1548 = vmatpush2.bf16.xpose.msra.mxu0 0
        %1549 = vmatprep.subr.bf16.mxu0 0
        %1550 = vmatpush2.bf16.xpose.msra.mxu0 0
        %1551 = vmatprep.subr.bf16.mxu0 0
        %1552 = vmatpush2.bf16.xpose.msra.mxu0 0
        %1553 = vmatprep.subr.bf16.mxu0 0
        %1554 = vmatpush2.bf16.xpose.msra.mxu0 0
        %1555 = vmatprep.subr.bf16.mxu0 0
        %1556 = vmatpush2.bf16.xpose.msra.mxu0 0
        %1557 = vmatprep.mubr.bf16.mxu0 0
        %1558 = vmatmul.mubr.bf16.gmra.mxu0 %v889
        %v1559 = vpop.f32.mrf.mxu0
        %v1560 = vadd.f32 0.0, %v1559
        %v1561 = vpop.f32.mrf.mxu0
        %v1562 = vpop.f32.mrf.mxu0
        %v1563 = vpop.f32.mrf.mxu0
        %1564 = vdwg.mxu0
        %v1565 = vpack.c.bf16 %v1560, %v1560
        %v1567 = vand.u32 %v1565, %v798
        %1569 = vmatprep.subr.bf16.mxu0 0
        %1570 = vmatpush1.bf16.msra.mxu0 0
        %1571 = vmatprep.subr.bf16.mxu0 0
        %1572 = vmatpush1.bf16.msra.mxu0 0
        %1573 = vmatprep.subr.bf16.mxu0 0
        %1574 = vmatpush1.bf16.msra.mxu0 0
        %1575 = vmatprep.subr.bf16.mxu0 0
        %1576 = vmatpush1.bf16.msra.mxu0 0
        %1577 = vmatprep.subr.bf16.mxu0 0
        %1578 = vmatpush1.bf16.msra.mxu0 0
        %1579 = vmatprep.subr.bf16.mxu0 0
        %1580 = vmatpush1.bf16.msra.mxu0 0
        %1581 = vmatprep.subr.bf16.mxu0 0
        %1582 = vmatpush1.bf16.msra.mxu0 0
        %1583 = vmatprep.subr.bf16.mxu0 0
        %1584 = vmatpush1.bf16.msra.mxu0 %v1567
        %1585 = vmatprep.subr.bf16.mxu0 0
        %1586 = vmatpush2.bf16.msra.mxu0 0
        %1587 = vmatprep.subr.bf16.mxu0 0
        %1588 = vmatpush2.bf16.msra.mxu0 0
        %1589 = vmatprep.subr.bf16.mxu0 0
        %1590 = vmatpush2.bf16.msra.mxu0 0
        %1591 = vmatprep.subr.bf16.mxu0 0
        %1592 = vmatpush2.bf16.msra.mxu0 0
        %1593 = vmatprep.subr.bf16.mxu0 0
        %1594 = vmatpush2.bf16.msra.mxu0 0
        %1595 = vmatprep.subr.bf16.mxu0 0
        %1596 = vmatpush2.bf16.msra.mxu0 0
        %1597 = vmatprep.subr.bf16.mxu0 0
        %1598 = vmatpush2.bf16.msra.mxu0 0
        %1599 = vmatprep.subr.bf16.mxu0 0
        %1600 = vmatpush2.bf16.msra.mxu0 0
        %1601 = vmatprep.mubr.bf16.mxu0 0
        %1602 = vmatmul.mubr.bf16.gmra.mxu0 %v950
        %v1603 = vpop.f32.mrf.mxu0
        %v1604 = vadd.f32 0.0, %v1603
        %v1605 = vpop.f32.mrf.mxu0
        %v1606 = vpop.f32.mrf.mxu0
        %v1607 = vadd.f32 0.0, %v1606
        %v1608 = vpop.f32.mrf.mxu0
        %1609 = vdwg.mxu0
        %v1610 = vadd.f32 %v837, %v1604
        %v1611 = vadd.f32 %v840, %v1607
        %v1612 = vmax.f32 %v1610, 0.0
        %v1613 = vmax.f32 %v1611, 0.0
        %v1614 = vpack.c.bf16 %v1613, %v1612
        %1615 = vmatprep.subr.bf16.mxu0 0
        %1616 = vmatpush1.bf16.msra.mxu0 0
        %1617 = vmatprep.subr.bf16.mxu0 0
        %1618 = vmatpush1.bf16.msra.mxu0 0
        %1619 = vmatprep.subr.bf16.mxu0 0
        %1620 = vmatpush1.bf16.msra.mxu0 0
        %1621 = vmatprep.subr.bf16.mxu0 0
        %1622 = vmatpush1.bf16.msra.mxu0 0
        %1623 = vmatprep.subr.bf16.mxu0 0
        %1624 = vmatpush1.bf16.msra.mxu0 0
        %1625 = vmatprep.subr.bf16.mxu0 0
        %1626 = vmatpush1.bf16.msra.mxu0 0
        %1627 = vmatprep.subr.bf16.mxu0 0
        %1628 = vmatpush1.bf16.msra.mxu0 0
        %1629 = vmatprep.subr.bf16.mxu0 0
        %1630 = vmatpush1.bf16.msra.mxu0 %v1614
        %1631 = vmatprep.subr.bf16.mxu0 0
        %1632 = vmatpush2.bf16.msra.mxu0 0
        %1633 = vmatprep.subr.bf16.mxu0 0
        %1634 = vmatpush2.bf16.msra.mxu0 0
        %1635 = vmatprep.subr.bf16.mxu0 0
        %1636 = vmatpush2.bf16.msra.mxu0 0
        %1637 = vmatprep.subr.bf16.mxu0 0
        %1638 = vmatpush2.bf16.msra.mxu0 0
        %1639 = vmatprep.subr.bf16.mxu0 0
        %1640 = vmatpush2.bf16.msra.mxu0 0
        %1641 = vmatprep.subr.bf16.mxu0 0
        %1642 = vmatpush2.bf16.msra.mxu0 0
        %1643 = vmatprep.subr.bf16.mxu0 0
        %1644 = vmatpush2.bf16.msra.mxu0 0
        %1645 = vmatprep.subr.bf16.mxu0 0
        %1646 = vmatpush2.bf16.msra.mxu0 0
        %1647 = vmatprep.mubr.bf16.mxu0 0
        %1648 = vmatmul.mubr.bf16.gmra.mxu0 %v1018
        %v1649 = vpop.f32.mrf.mxu0
        %v1650 = vadd.f32 %v1004, %v1649
        %v1651 = vpop.f32.mrf.mxu0
        %v1652 = vpop.f32.mrf.mxu0
        %v1653 = vadd.f32 %v1009, %v1652
        %v1654 = vpop.f32.mrf.mxu0
        %1655 = vdwg.mxu0
        %v1656 = vmax.f32 %v1650, 0.0
        %v1657 = vmax.f32 %v1653, 0.0
        %v1658 = vmax.f32 %v1459, %v1656
        %v1659 = vmax.f32 %v1460, %v1657
        %1660 = vst.msk [vmem:[%s304] sm:$0xff] %vm843, %v1658
        %1661 = vst.msk [vmem:[%s304 + $0x8] sm:$0xff] %vm843, %v1659
        %s1662 = sand.u32 %s202, 1
        %s1663 = scalar_lea.sflag [#allocation3], %s1662
        %s1664 = sand.u32 %s202, 1
        %s1665 = smul.addr %s1664, 16
        %s1666 = scalar_lea.vmem [#allocation2], %s1665
        // Predicated region
        $region49: #{tpu_custom_call.1} parent=47 // pred_check
          %p1667 = pneg %p212
        $region50: #{tpu_custom_call.1} parent=47 // pred_check_branch
          %1669 = sbr.rel (%p1667) target = $region52
        $region51: #{tpu_custom_call.1} parent=47 // pred_region
          %s1671 = ssub.s32 256, 256
          %1672 = vsyncadd %s1663, %s1671
          %s1673 = smul.addr %s25, 2
          %s1674 = sadd.s32 %s26, %s1673
          %s1675 = smul.addr %s1674, 128
          %s1676 = scalar_lea.hbm %s7, %s1675
          %s1677 = sshll.u32 %s1666, 4
          %s1678 = int_to_ptr.vmem [resolvable:$true] %s1677
          %1683 = dma.vmem_to_hbm [thread:$0]  %s1678, 256, %s1676, %s1663, 128, 128, 8
        $region52: #{tpu_custom_call.1} parent=47 // pred_fallthru
          _
      $region48: #{tpu_custom_call.1} parent=5 // pred_fallthru
        _
      %p1684 = scmp.le.s32.totalorder 2, %s16
      // Predicated region
      $region53: #{tpu_custom_call.1} parent=5 // pred_check
        %p1685 = pneg %p1684
      $region54: #{tpu_custom_call.1} parent=5 // pred_check_branch
        %1687 = sbr.rel (%p1685) target = $region56
      $region55: #{tpu_custom_call.1} parent=5 // pred_region
        %s1688 = ssub.s32 %s16, 2
        // Predicated region
        $region57: #{tpu_custom_call.1} parent=55 // pred_check
          %p1689 = pneg %p218
        $region58: #{tpu_custom_call.1} parent=55 // pred_check_branch
          %1691 = sbr.rel (%p1689) target = $region60
        $region59: #{tpu_custom_call.1} parent=55 // pred_region
          %s1692 = sand.u32 %s203, 1
          %s1693 = scalar_lea.sflag [#allocation3], %s1692
          %s1694 = sand.u32 %s203, 1
          %s1695 = smul.addr %s1694, 16
          %s1696 = scalar_lea.vmem [#allocation2], %s1695
          %1697 = dma.done %s1693, 256
        $region60: #{tpu_custom_call.1} parent=55 // pred_fallthru
          _
      $region56: #{tpu_custom_call.1} parent=5 // pred_fallthru
        _
    $region6: #{tpu_custom_call.1} parent=1 // loop_footer
      %s20 = sadd.s32 1, %s16
    $region7: #{tpu_custom_call.1} parent=1 // loop_footer_branch
      %15 = sbr.rel target = $region3
    $region8: #{tpu_custom_call.1} parent=1 // loop_exit
      _
    %1698 = vsyncpa [#allocation3], 1
    %s1699 = scalar_lea.sflag [#allocation3], 1
    %1700 = vsyncpa %s1699, 1

</llo_original>
